<compile_context>
chip_gen: v6e
topology: v6e:2x2x1
jax: 0.10.0
libtpu: 0.0.40
codegen_flags: <defaults>
</compile_context>

<pallas_src>
import functools

import jax
import jax.numpy as jnp
from jax import lax
from jax.experimental import pallas as pl
from jax.experimental.pallas import tpu as pltpu

IN_CHANNELS = 3
OUT_CHANNELS = 16
KERNEL_SIZE = 3
NUM_GROUPS = 8
EPS = 1e-5


def _fused_kernel(p_ref, w_ref, v_ref, o_ref, *, num_groups):
    # p_ref: (1, K, M) im2col patches for one sample
    # w_ref: (C, K)    conv weight with `scale` folded in
    # v_ref: (C, 3)    col0 = fused bias, col1 = gamma, col2 = beta
    # o_ref: (1, C, M) flat NCHW output slab
    _, C, M = o_ref.shape
    G = num_groups
    CG = C // G

    # ---- conv as ONE MXU matmul over the im2col patches (f32-accurate) ----
    y = jnp.dot(w_ref[...], p_ref[0],
                preferred_element_type=jnp.float32,
                precision=lax.Precision.HIGHEST)            # (C, M)
    y = y + v_ref[:, 0:1]                                   # (conv_b + bias) * scale
    y = 1.0 / (1.0 + jnp.exp(-y))                           # sigmoid (EUP exp)

    # ---- group norm: two-pass (mean, then E[(y-mean)^2]) in exact f32 ----
    inv_cnt = 1.0 / float(M * CG)
    cid = lax.broadcasted_iota(jnp.int32, (C, 1), 0)

    ch_sum = jnp.sum(y, axis=1, keepdims=True)              # (C, 1) per-channel sums
    mean_c = jnp.zeros((C, 1), jnp.float32)
    for g in range(G):                                      # unrolled: G tiny selects
        in_g = (cid >= g * CG) & (cid < (g + 1) * CG)
        g_mean = jnp.sum(jnp.where(in_g, ch_sum, 0.0)) * inv_cnt
        mean_c = jnp.where(in_g, g_mean, mean_c)

    d = y - mean_c                                          # centered (C, M)
    ch_sqs = jnp.sum(d * d, axis=1, keepdims=True)          # (C, 1)
    var_c = jnp.zeros((C, 1), jnp.float32)
    for g in range(G):
        in_g = (cid >= g * CG) & (cid < (g + 1) * CG)
        g_var = jnp.sum(jnp.where(in_g, ch_sqs, 0.0)) * inv_cnt
        var_c = jnp.where(in_g, g_var, var_c)
    inv_c = lax.rsqrt(var_c + EPS)

    o_ref[0] = d * (inv_c * v_ref[:, 1:2]) + v_ref[:, 2:3]


def fused_conv_bias_scale_sigmoid_groupnorm(x_nchw, conv_w_oihw, conv_b, bias,
                                            scale, gn_w, gn_b, num_groups):
    N, Cin, H, W = x_nchw.shape
    Cout, _, KH, KW = conv_w_oihw.shape
    HO, WO = H - KH + 1, W - KW + 1
    K, M = Cin * KH * KW, HO * WO

    x = x_nchw.astype(jnp.float32)
    # im2col in the wrapper (plain XLA); K ordering (cin, kh, kw) matches OIHW flatten.
    cols = [x[:, :, kh:kh + HO, kw:kw + WO] for kh in range(KH) for kw in range(KW)]
    patches = jnp.stack(cols, axis=2).reshape(N, K, M)                  # (N, K, M)

    s = scale.reshape(Cout).astype(jnp.float32)
    w = conv_w_oihw.reshape(Cout, K).astype(jnp.float32) * s[:, None]   # fold scale
    fused_bias = (conv_b.reshape(Cout).astype(jnp.float32)
                  + bias.reshape(Cout).astype(jnp.float32)) * s
    vec = jnp.stack([fused_bias,
                     gn_w.reshape(Cout).astype(jnp.float32),
                     gn_b.reshape(Cout).astype(jnp.float32)], axis=1)   # (Cout, 3)

    kernel = functools.partial(_fused_kernel, num_groups=num_groups)
    out_flat = pl.pallas_call(
        kernel,
        out_shape=jax.ShapeDtypeStruct((N, Cout, M), jnp.float32),
        grid_spec=pltpu.PrefetchScalarGridSpec(
            num_scalar_prefetch=0,
            grid=(N,),
            in_specs=[
                pl.BlockSpec((1, K, M), lambda n: (n, 0, 0)),
                pl.BlockSpec((Cout, K), lambda n: (0, 0)),
                pl.BlockSpec((Cout, 3), lambda n: (0, 0)),
            ],
            out_specs=pl.BlockSpec((1, Cout, M), lambda n: (n, 0, 0)),
        ),
        compiler_params=pltpu.CompilerParams(
            dimension_semantics=("parallel",)),   # independent batch axis (2 TCs on v7x)
        cost_estimate=pl.CostEstimate(
            flops=2 * N * M * K * Cout,
            transcendentals=N * M * Cout,
            bytes_accessed=4 * (N * K * M + Cout * K + Cout * 3 + N * Cout * M)),
    )(patches, w, vec)

    return out_flat.reshape(N, Cout, HO, WO)   # already NCHW; no output transpose


def _reference(x_nchw, conv_w, conv_b, bias, scale, gn_w, gn_b, num_groups):
    y = lax.conv_general_dilated(
        x_nchw, conv_w, window_strides=(1, 1), padding="VALID",
        dimension_numbers=("NCHW", "OIHW", "NCHW"),
        precision=lax.Precision.HIGHEST)
    y = y + conv_b.reshape(1, -1, 1, 1)
    y = y + bias.reshape(1, -1, 1, 1)
    y = y * scale.reshape(1, -1, 1, 1)
    y = jax.nn.sigmoid(y)
    N, C, H, W = y.shape
    yg = y.reshape(N, num_groups, C // num_groups, H, W)
    mean = yg.mean(axis=(2, 3, 4), keepdims=True)
    var = ((yg - mean) ** 2).mean(axis=(2, 3, 4), keepdims=True)
    yn = ((yg - mean) / jnp.sqrt(var + EPS)).reshape(N, C, H, W)
    return yn * gn_w.reshape(1, -1, 1, 1) + gn_b.reshape(1, -1, 1, 1)


if __name__ == "__main__":
    key = jax.random.PRNGKey(0)
    kx, kw, kb, kbias, kscale = jax.random.split(key, 5)

    N, H, W = 2, 16, 16
    x = jax.random.normal(kx, (N, IN_CHANNELS, H, W), jnp.float32)

    fan_in = IN_CHANNELS * KERNEL_SIZE * KERNEL_SIZE
    limit = 1.0 / jnp.sqrt(jnp.float32(fan_in))
    conv_w = jax.random.uniform(kw, (OUT_CHANNELS, IN_CHANNELS, KERNEL_SIZE, KERNEL_SIZE),
                                jnp.float32, -limit, limit)
    conv_b = jax.random.uniform(kb, (OUT_CHANNELS,), jnp.float32, -limit, limit) + 0.02
    bias = jax.random.normal(kbias, (OUT_CHANNELS, 1, 1), jnp.float32) * 0.02
    scale = jax.random.normal(kscale, (OUT_CHANNELS, 1, 1), jnp.float32) * 0.02
    gn_w = jnp.ones((OUT_CHANNELS,), jnp.float32)
    gn_b = jnp.zeros((OUT_CHANNELS,), jnp.float32) + 0.02

    out = fused_conv_bias_scale_sigmoid_groupnorm(
        x, conv_w, conv_b, bias, scale, gn_w, gn_b, NUM_GROUPS)
    out = jax.block_until_ready(out)

    ref = _reference(x, conv_w, conv_b, bias, scale, gn_w, gn_b, NUM_GROUPS)
    assert out.shape == (N, OUT_CHANNELS, H - KERNEL_SIZE + 1, W - KERNEL_SIZE + 1)
    # note: group-norm divides by a tiny std (~4e-3 with this init), amplifying any
    # upstream rounding ~200x, hence the 2e-3 tolerance against the f32 reference.
    assert jnp.allclose(out, ref, atol=2e-3, rtol=2e-3)

    print("KERNEL_OK")
</pallas_src>

<mosaic_0001>
module attributes {stable_mosaic.version = 11 : i64} {
  func.func @_fused_kernel(%arg0: i32, %arg1: memref<1x27x196xf32, #tpu.memory_space<vmem>>, %arg2: memref<16x27xf32, #tpu.memory_space<vmem>>, %arg3: memref<16x3xf32, #tpu.memory_space<vmem>>, %arg4: memref<1x16x196xf32, #tpu.memory_space<vmem>>) attributes {dimension_semantics = [#tpu.dimension_semantics<parallel>], iteration_bounds = array<i64: 2>, scalar_prefetch = 0 : i64, scratch_operands = 0 : i64, tpu.core_type = #tpu.core_type<tc>, window_params = [{transform_indices = @transform_0, window_bounds = array<i64: 1, 27, 196>}, {pipeline_mode = #tpu.pipeline_mode<synchronous>, transform_indices = @transform_1, window_bounds = array<i64: 16, 27>}, {pipeline_mode = #tpu.pipeline_mode<synchronous>, transform_indices = @transform_2, window_bounds = array<i64: 16, 3>}, {transform_indices = @transform_3, window_bounds = array<i64: 1, 16, 196>}]} {
    %c0 = arith.constant 0 : index
    %c0_0 = arith.constant 0 : index
    %0 = vector.load %arg2[%c0, %c0_0] : memref<16x27xf32, #tpu.memory_space<vmem>>, vector<16x27xf32>
    %c0_1 = arith.constant 0 : index
    %c0_2 = arith.constant 0 : index
    %c0_3 = arith.constant 0 : index
    %1 = vector.load %arg1[%c0_1, %c0_2, %c0_3] : memref<1x27x196xf32, #tpu.memory_space<vmem>>, vector<1x27x196xf32>
    %2 = vector.shape_cast %1 : vector<1x27x196xf32> to vector<27x196xf32>
    %cst = arith.constant dense<0.000000e+00> : vector<16x196xf32>
    %3 = tpu.matmul %0, %2, %cst {dimension_numbers = #tpu.dot_dimension_numbers<[1], [0], [0], [1], [0, 0, 1, 1], [], []>, precision = #tpu.contract_precision<fp32>} : vector<16x27xf32>, vector<27x196xf32>, vector<16x196xf32> -> vector<16x196xf32>
    %c0_4 = arith.constant 0 : index
    %c0_5 = arith.constant 0 : index
    %4 = vector.load %arg3[%c0_4, %c0_5] : memref<16x3xf32, #tpu.memory_space<vmem>>, vector<16x1xf32>
    %5 = vector.broadcast %4 : vector<16x1xf32> to vector<16x196xf32>
    %6 = arith.addf %3, %5 : vector<16x196xf32>
    %cst_6 = arith.constant 0.000000e+00 : f32
    %7 = vector.broadcast %cst_6 : f32 to vector<16x196xf32>
    %8 = arith.subf %7, %6 : vector<16x196xf32>
    %9 = math.exp %8 : vector<16x196xf32>
    %cst_7 = arith.constant 1.000000e+00 : f32
    %10 = vector.broadcast %cst_7 : f32 to vector<16x196xf32>
    %11 = arith.addf %10, %9 : vector<16x196xf32>
    %cst_8 = arith.constant 1.000000e+00 : f32
    %12 = vector.broadcast %cst_8 : f32 to vector<16x196xf32>
    %13 = arith.divf %12, %11 : vector<16x196xf32>
    %14 = tpu.iota {dimensions = array<i32: 0>} : vector<16x1xi32>
    %cst_9 = arith.constant dense<0.000000e+00> : vector<16xf32>
    %15 = vector.multi_reduction <add>, %13, %cst_9 [1] : vector<16x196xf32> to vector<16xf32>
    %16 = vector.shape_cast %15 : vector<16xf32> to vector<16x1xf32>
    %cst_10 = arith.constant 0.000000e+00 : f32
    %17 = vector.broadcast %cst_10 : f32 to vector<16x1xf32>
    %c0_i32 = arith.constant 0 : i32
    %18 = vector.broadcast %c0_i32 : i32 to vector<16x1xi32>
    %19 = arith.cmpi sge, %14, %18 : vector<16x1xi32>
    %c2_i32 = arith.constant 2 : i32
    %20 = vector.broadcast %c2_i32 : i32 to vector<16x1xi32>
    %21 = arith.cmpi slt, %14, %20 : vector<16x1xi32>
    %22 = arith.andi %19, %21 : vector<16x1xi1>
    %cst_11 = arith.constant 0.000000e+00 : f32
    %23 = vector.broadcast %cst_11 : f32 to vector<16x1xf32>
    %24 = arith.select %22, %16, %23 : vector<16x1xi1>, vector<16x1xf32>
    %25 = vector.shape_cast %24 : vector<16x1xf32> to vector<1x16x1xf32>
    %cst_12 = arith.constant dense<0.000000e+00> : vector<1xf32>
    %26 = vector.multi_reduction <add>, %25, %cst_12 [1, 2] : vector<1x16x1xf32> to vector<1xf32>
    %27 = vector.shape_cast %26 : vector<1xf32> to vector<1x1x1xf32>
    %28 = vector.extract %27[0, 0, 0] : f32 from vector<1x1x1xf32>
    %cst_13 = arith.constant 0.00255102036 : f32
    %29 = arith.mulf %28, %cst_13 : f32
    %30 = vector.broadcast %29 : f32 to vector<16x1xf32>
    %31 = arith.select %22, %30, %17 : vector<16x1xi1>, vector<16x1xf32>
    %c2_i32_14 = arith.constant 2 : i32
    %32 = vector.broadcast %c2_i32_14 : i32 to vector<16x1xi32>
    %33 = arith.cmpi sge, %14, %32 : vector<16x1xi32>
    %c4_i32 = arith.constant 4 : i32
    %34 = vector.broadcast %c4_i32 : i32 to vector<16x1xi32>
    %35 = arith.cmpi slt, %14, %34 : vector<16x1xi32>
    %36 = arith.andi %33, %35 : vector<16x1xi1>
    %cst_15 = arith.constant 0.000000e+00 : f32
    %37 = vector.broadcast %cst_15 : f32 to vector<16x1xf32>
    %38 = arith.select %36, %16, %37 : vector<16x1xi1>, vector<16x1xf32>
    %39 = vector.shape_cast %38 : vector<16x1xf32> to vector<1x16x1xf32>
    %cst_16 = arith.constant dense<0.000000e+00> : vector<1xf32>
    %40 = vector.multi_reduction <add>, %39, %cst_16 [1, 2] : vector<1x16x1xf32> to vector<1xf32>
    %41 = vector.shape_cast %40 : vector<1xf32> to vector<1x1x1xf32>
    %42 = vector.extract %41[0, 0, 0] : f32 from vector<1x1x1xf32>
    %cst_17 = arith.constant 0.00255102036 : f32
    %43 = arith.mulf %42, %cst_17 : f32
    %44 = vector.broadcast %43 : f32 to vector<16x1xf32>
    %45 = arith.select %36, %44, %31 : vector<16x1xi1>, vector<16x1xf32>
    %c4_i32_18 = arith.constant 4 : i32
    %46 = vector.broadcast %c4_i32_18 : i32 to vector<16x1xi32>
    %47 = arith.cmpi sge, %14, %46 : vector<16x1xi32>
    %c6_i32 = arith.constant 6 : i32
    %48 = vector.broadcast %c6_i32 : i32 to vector<16x1xi32>
    %49 = arith.cmpi slt, %14, %48 : vector<16x1xi32>
    %50 = arith.andi %47, %49 : vector<16x1xi1>
    %cst_19 = arith.constant 0.000000e+00 : f32
    %51 = vector.broadcast %cst_19 : f32 to vector<16x1xf32>
    %52 = arith.select %50, %16, %51 : vector<16x1xi1>, vector<16x1xf32>
    %53 = vector.shape_cast %52 : vector<16x1xf32> to vector<1x16x1xf32>
    %cst_20 = arith.constant dense<0.000000e+00> : vector<1xf32>
    %54 = vector.multi_reduction <add>, %53, %cst_20 [1, 2] : vector<1x16x1xf32> to vector<1xf32>
    %55 = vector.shape_cast %54 : vector<1xf32> to vector<1x1x1xf32>
    %56 = vector.extract %55[0, 0, 0] : f32 from vector<1x1x1xf32>
    %cst_21 = arith.constant 0.00255102036 : f32
    %57 = arith.mulf %56, %cst_21 : f32
    %58 = vector.broadcast %57 : f32 to vector<16x1xf32>
    %59 = arith.select %50, %58, %45 : vector<16x1xi1>, vector<16x1xf32>
    %c6_i32_22 = arith.constant 6 : i32
    %60 = vector.broadcast %c6_i32_22 : i32 to vector<16x1xi32>
    %61 = arith.cmpi sge, %14, %60 : vector<16x1xi32>
    %c8_i32 = arith.constant 8 : i32
    %62 = vector.broadcast %c8_i32 : i32 to vector<16x1xi32>
    %63 = arith.cmpi slt, %14, %62 : vector<16x1xi32>
    %64 = arith.andi %61, %63 : vector<16x1xi1>
    %cst_23 = arith.constant 0.000000e+00 : f32
    %65 = vector.broadcast %cst_23 : f32 to vector<16x1xf32>
    %66 = arith.select %64, %16, %65 : vector<16x1xi1>, vector<16x1xf32>
    %67 = vector.shape_cast %66 : vector<16x1xf32> to vector<1x16x1xf32>
    %cst_24 = arith.constant dense<0.000000e+00> : vector<1xf32>
    %68 = vector.multi_reduction <add>, %67, %cst_24 [1, 2] : vector<1x16x1xf32> to vector<1xf32>
    %69 = vector.shape_cast %68 : vector<1xf32> to vector<1x1x1xf32>
    %70 = vector.extract %69[0, 0, 0] : f32 from vector<1x1x1xf32>
    %cst_25 = arith.constant 0.00255102036 : f32
    %71 = arith.mulf %70, %cst_25 : f32
    %72 = vector.broadcast %71 : f32 to vector<16x1xf32>
    %73 = arith.select %64, %72, %59 : vector<16x1xi1>, vector<16x1xf32>
    %c8_i32_26 = arith.constant 8 : i32
    %74 = vector.broadcast %c8_i32_26 : i32 to vector<16x1xi32>
    %75 = arith.cmpi sge, %14, %74 : vector<16x1xi32>
    %c10_i32 = arith.constant 10 : i32
    %76 = vector.broadcast %c10_i32 : i32 to vector<16x1xi32>
    %77 = arith.cmpi slt, %14, %76 : vector<16x1xi32>
    %78 = arith.andi %75, %77 : vector<16x1xi1>
    %cst_27 = arith.constant 0.000000e+00 : f32
    %79 = vector.broadcast %cst_27 : f32 to vector<16x1xf32>
    %80 = arith.select %78, %16, %79 : vector<16x1xi1>, vector<16x1xf32>
    %81 = vector.shape_cast %80 : vector<16x1xf32> to vector<1x16x1xf32>
    %cst_28 = arith.constant dense<0.000000e+00> : vector<1xf32>
    %82 = vector.multi_reduction <add>, %81, %cst_28 [1, 2] : vector<1x16x1xf32> to vector<1xf32>
    %83 = vector.shape_cast %82 : vector<1xf32> to vector<1x1x1xf32>
    %84 = vector.extract %83[0, 0, 0] : f32 from vector<1x1x1xf32>
    %cst_29 = arith.constant 0.00255102036 : f32
    %85 = arith.mulf %84, %cst_29 : f32
    %86 = vector.broadcast %85 : f32 to vector<16x1xf32>
    %87 = arith.select %78, %86, %73 : vector<16x1xi1>, vector<16x1xf32>
    %c10_i32_30 = arith.constant 10 : i32
    %88 = vector.broadcast %c10_i32_30 : i32 to vector<16x1xi32>
    %89 = arith.cmpi sge, %14, %88 : vector<16x1xi32>
    %c12_i32 = arith.constant 12 : i32
    %90 = vector.broadcast %c12_i32 : i32 to vector<16x1xi32>
    %91 = arith.cmpi slt, %14, %90 : vector<16x1xi32>
    %92 = arith.andi %89, %91 : vector<16x1xi1>
    %cst_31 = arith.constant 0.000000e+00 : f32
    %93 = vector.broadcast %cst_31 : f32 to vector<16x1xf32>
    %94 = arith.select %92, %16, %93 : vector<16x1xi1>, vector<16x1xf32>
    %95 = vector.shape_cast %94 : vector<16x1xf32> to vector<1x16x1xf32>
    %cst_32 = arith.constant dense<0.000000e+00> : vector<1xf32>
    %96 = vector.multi_reduction <add>, %95, %cst_32 [1, 2] : vector<1x16x1xf32> to vector<1xf32>
    %97 = vector.shape_cast %96 : vector<1xf32> to vector<1x1x1xf32>
    %98 = vector.extract %97[0, 0, 0] : f32 from vector<1x1x1xf32>
    %cst_33 = arith.constant 0.00255102036 : f32
    %99 = arith.mulf %98, %cst_33 : f32
    %100 = vector.broadcast %99 : f32 to vector<16x1xf32>
    %101 = arith.select %92, %100, %87 : vector<16x1xi1>, vector<16x1xf32>
    %c12_i32_34 = arith.constant 12 : i32
    %102 = vector.broadcast %c12_i32_34 : i32 to vector<16x1xi32>
    %103 = arith.cmpi sge, %14, %102 : vector<16x1xi32>
    %c14_i32 = arith.constant 14 : i32
    %104 = vector.broadcast %c14_i32 : i32 to vector<16x1xi32>
    %105 = arith.cmpi slt, %14, %104 : vector<16x1xi32>
    %106 = arith.andi %103, %105 : vector<16x1xi1>
    %cst_35 = arith.constant 0.000000e+00 : f32
    %107 = vector.broadcast %cst_35 : f32 to vector<16x1xf32>
    %108 = arith.select %106, %16, %107 : vector<16x1xi1>, vector<16x1xf32>
    %109 = vector.shape_cast %108 : vector<16x1xf32> to vector<1x16x1xf32>
    %cst_36 = arith.constant dense<0.000000e+00> : vector<1xf32>
    %110 = vector.multi_reduction <add>, %109, %cst_36 [1, 2] : vector<1x16x1xf32> to vector<1xf32>
    %111 = vector.shape_cast %110 : vector<1xf32> to vector<1x1x1xf32>
    %112 = vector.extract %111[0, 0, 0] : f32 from vector<1x1x1xf32>
    %cst_37 = arith.constant 0.00255102036 : f32
    %113 = arith.mulf %112, %cst_37 : f32
    %114 = vector.broadcast %113 : f32 to vector<16x1xf32>
    %115 = arith.select %106, %114, %101 : vector<16x1xi1>, vector<16x1xf32>
    %c14_i32_38 = arith.constant 14 : i32
    %116 = vector.broadcast %c14_i32_38 : i32 to vector<16x1xi32>
    %117 = arith.cmpi sge, %14, %116 : vector<16x1xi32>
    %c16_i32 = arith.constant 16 : i32
    %118 = vector.broadcast %c16_i32 : i32 to vector<16x1xi32>
    %119 = arith.cmpi slt, %14, %118 : vector<16x1xi32>
    %120 = arith.andi %117, %119 : vector<16x1xi1>
    %cst_39 = arith.constant 0.000000e+00 : f32
    %121 = vector.broadcast %cst_39 : f32 to vector<16x1xf32>
    %122 = arith.select %120, %16, %121 : vector<16x1xi1>, vector<16x1xf32>
    %123 = vector.shape_cast %122 : vector<16x1xf32> to vector<1x16x1xf32>
    %cst_40 = arith.constant dense<0.000000e+00> : vector<1xf32>
    %124 = vector.multi_reduction <add>, %123, %cst_40 [1, 2] : vector<1x16x1xf32> to vector<1xf32>
    %125 = vector.shape_cast %124 : vector<1xf32> to vector<1x1x1xf32>
    %126 = vector.extract %125[0, 0, 0] : f32 from vector<1x1x1xf32>
    %cst_41 = arith.constant 0.00255102036 : f32
    %127 = arith.mulf %126, %cst_41 : f32
    %128 = vector.broadcast %127 : f32 to vector<16x1xf32>
    %129 = arith.select %120, %128, %115 : vector<16x1xi1>, vector<16x1xf32>
    %130 = vector.broadcast %129 : vector<16x1xf32> to vector<16x196xf32>
    %131 = arith.subf %13, %130 : vector<16x196xf32>
    %132 = arith.mulf %131, %131 : vector<16x196xf32>
    %cst_42 = arith.constant dense<0.000000e+00> : vector<16xf32>
    %133 = vector.multi_reduction <add>, %132, %cst_42 [1] : vector<16x196xf32> to vector<16xf32>
    %134 = vector.shape_cast %133 : vector<16xf32> to vector<16x1xf32>
    %cst_43 = arith.constant 0.000000e+00 : f32
    %135 = vector.broadcast %cst_43 : f32 to vector<16x1xf32>
    %c0_i32_44 = arith.constant 0 : i32
    %136 = vector.broadcast %c0_i32_44 : i32 to vector<16x1xi32>
    %137 = arith.cmpi sge, %14, %136 : vector<16x1xi32>
    %c2_i32_45 = arith.constant 2 : i32
    %138 = vector.broadcast %c2_i32_45 : i32 to vector<16x1xi32>
    %139 = arith.cmpi slt, %14, %138 : vector<16x1xi32>
    %140 = arith.andi %137, %139 : vector<16x1xi1>
    %cst_46 = arith.constant 0.000000e+00 : f32
    %141 = vector.broadcast %cst_46 : f32 to vector<16x1xf32>
    %142 = arith.select %140, %134, %141 : vector<16x1xi1>, vector<16x1xf32>
    %143 = vector.shape_cast %142 : vector<16x1xf32> to vector<1x16x1xf32>
    %cst_47 = arith.constant dense<0.000000e+00> : vector<1xf32>
    %144 = vector.multi_reduction <add>, %143, %cst_47 [1, 2] : vector<1x16x1xf32> to vector<1xf32>
    %145 = vector.shape_cast %144 : vector<1xf32> to vector<1x1x1xf32>
    %146 = vector.extract %145[0, 0, 0] : f32 from vector<1x1x1xf32>
    %cst_48 = arith.constant 0.00255102036 : f32
    %147 = arith.mulf %146, %cst_48 : f32
    %148 = vector.broadcast %147 : f32 to vector<16x1xf32>
    %149 = arith.select %140, %148, %135 : vector<16x1xi1>, vector<16x1xf32>
    %c2_i32_49 = arith.constant 2 : i32
    %150 = vector.broadcast %c2_i32_49 : i32 to vector<16x1xi32>
    %151 = arith.cmpi sge, %14, %150 : vector<16x1xi32>
    %c4_i32_50 = arith.constant 4 : i32
    %152 = vector.broadcast %c4_i32_50 : i32 to vector<16x1xi32>
    %153 = arith.cmpi slt, %14, %152 : vector<16x1xi32>
    %154 = arith.andi %151, %153 : vector<16x1xi1>
    %cst_51 = arith.constant 0.000000e+00 : f32
    %155 = vector.broadcast %cst_51 : f32 to vector<16x1xf32>
    %156 = arith.select %154, %134, %155 : vector<16x1xi1>, vector<16x1xf32>
    %157 = vector.shape_cast %156 : vector<16x1xf32> to vector<1x16x1xf32>
    %cst_52 = arith.constant dense<0.000000e+00> : vector<1xf32>
    %158 = vector.multi_reduction <add>, %157, %cst_52 [1, 2] : vector<1x16x1xf32> to vector<1xf32>
    %159 = vector.shape_cast %158 : vector<1xf32> to vector<1x1x1xf32>
    %160 = vector.extract %159[0, 0, 0] : f32 from vector<1x1x1xf32>
    %cst_53 = arith.constant 0.00255102036 : f32
    %161 = arith.mulf %160, %cst_53 : f32
    %162 = vector.broadcast %161 : f32 to vector<16x1xf32>
    %163 = arith.select %154, %162, %149 : vector<16x1xi1>, vector<16x1xf32>
    %c4_i32_54 = arith.constant 4 : i32
    %164 = vector.broadcast %c4_i32_54 : i32 to vector<16x1xi32>
    %165 = arith.cmpi sge, %14, %164 : vector<16x1xi32>
    %c6_i32_55 = arith.constant 6 : i32
    %166 = vector.broadcast %c6_i32_55 : i32 to vector<16x1xi32>
    %167 = arith.cmpi slt, %14, %166 : vector<16x1xi32>
    %168 = arith.andi %165, %167 : vector<16x1xi1>
    %cst_56 = arith.constant 0.000000e+00 : f32
    %169 = vector.broadcast %cst_56 : f32 to vector<16x1xf32>
    %170 = arith.select %168, %134, %169 : vector<16x1xi1>, vector<16x1xf32>
    %171 = vector.shape_cast %170 : vector<16x1xf32> to vector<1x16x1xf32>
    %cst_57 = arith.constant dense<0.000000e+00> : vector<1xf32>
    %172 = vector.multi_reduction <add>, %171, %cst_57 [1, 2] : vector<1x16x1xf32> to vector<1xf32>
    %173 = vector.shape_cast %172 : vector<1xf32> to vector<1x1x1xf32>
    %174 = vector.extract %173[0, 0, 0] : f32 from vector<1x1x1xf32>
    %cst_58 = arith.constant 0.00255102036 : f32
    %175 = arith.mulf %174, %cst_58 : f32
    %176 = vector.broadcast %175 : f32 to vector<16x1xf32>
    %177 = arith.select %168, %176, %163 : vector<16x1xi1>, vector<16x1xf32>
    %c6_i32_59 = arith.constant 6 : i32
    %178 = vector.broadcast %c6_i32_59 : i32 to vector<16x1xi32>
    %179 = arith.cmpi sge, %14, %178 : vector<16x1xi32>
    %c8_i32_60 = arith.constant 8 : i32
    %180 = vector.broadcast %c8_i32_60 : i32 to vector<16x1xi32>
    %181 = arith.cmpi slt, %14, %180 : vector<16x1xi32>
    %182 = arith.andi %179, %181 : vector<16x1xi1>
    %cst_61 = arith.constant 0.000000e+00 : f32
    %183 = vector.broadcast %cst_61 : f32 to vector<16x1xf32>
    %184 = arith.select %182, %134, %183 : vector<16x1xi1>, vector<16x1xf32>
    %185 = vector.shape_cast %184 : vector<16x1xf32> to vector<1x16x1xf32>
    %cst_62 = arith.constant dense<0.000000e+00> : vector<1xf32>
    %186 = vector.multi_reduction <add>, %185, %cst_62 [1, 2] : vector<1x16x1xf32> to vector<1xf32>
    %187 = vector.shape_cast %186 : vector<1xf32> to vector<1x1x1xf32>
    %188 = vector.extract %187[0, 0, 0] : f32 from vector<1x1x1xf32>
    %cst_63 = arith.constant 0.00255102036 : f32
    %189 = arith.mulf %188, %cst_63 : f32
    %190 = vector.broadcast %189 : f32 to vector<16x1xf32>
    %191 = arith.select %182, %190, %177 : vector<16x1xi1>, vector<16x1xf32>
    %c8_i32_64 = arith.constant 8 : i32
    %192 = vector.broadcast %c8_i32_64 : i32 to vector<16x1xi32>
    %193 = arith.cmpi sge, %14, %192 : vector<16x1xi32>
    %c10_i32_65 = arith.constant 10 : i32
    %194 = vector.broadcast %c10_i32_65 : i32 to vector<16x1xi32>
    %195 = arith.cmpi slt, %14, %194 : vector<16x1xi32>
    %196 = arith.andi %193, %195 : vector<16x1xi1>
    %cst_66 = arith.constant 0.000000e+00 : f32
    %197 = vector.broadcast %cst_66 : f32 to vector<16x1xf32>
    %198 = arith.select %196, %134, %197 : vector<16x1xi1>, vector<16x1xf32>
    %199 = vector.shape_cast %198 : vector<16x1xf32> to vector<1x16x1xf32>
    %cst_67 = arith.constant dense<0.000000e+00> : vector<1xf32>
    %200 = vector.multi_reduction <add>, %199, %cst_67 [1, 2] : vector<1x16x1xf32> to vector<1xf32>
    %201 = vector.shape_cast %200 : vector<1xf32> to vector<1x1x1xf32>
    %202 = vector.extract %201[0, 0, 0] : f32 from vector<1x1x1xf32>
    %cst_68 = arith.constant 0.00255102036 : f32
    %203 = arith.mulf %202, %cst_68 : f32
    %204 = vector.broadcast %203 : f32 to vector<16x1xf32>
    %205 = arith.select %196, %204, %191 : vector<16x1xi1>, vector<16x1xf32>
    %c10_i32_69 = arith.constant 10 : i32
    %206 = vector.broadcast %c10_i32_69 : i32 to vector<16x1xi32>
    %207 = arith.cmpi sge, %14, %206 : vector<16x1xi32>
    %c12_i32_70 = arith.constant 12 : i32
    %208 = vector.broadcast %c12_i32_70 : i32 to vector<16x1xi32>
    %209 = arith.cmpi slt, %14, %208 : vector<16x1xi32>
    %210 = arith.andi %207, %209 : vector<16x1xi1>
    %cst_71 = arith.constant 0.000000e+00 : f32
    %211 = vector.broadcast %cst_71 : f32 to vector<16x1xf32>
    %212 = arith.select %210, %134, %211 : vector<16x1xi1>, vector<16x1xf32>
    %213 = vector.shape_cast %212 : vector<16x1xf32> to vector<1x16x1xf32>
    %cst_72 = arith.constant dense<0.000000e+00> : vector<1xf32>
    %214 = vector.multi_reduction <add>, %213, %cst_72 [1, 2] : vector<1x16x1xf32> to vector<1xf32>
    %215 = vector.shape_cast %214 : vector<1xf32> to vector<1x1x1xf32>
    %216 = vector.extract %215[0, 0, 0] : f32 from vector<1x1x1xf32>
    %cst_73 = arith.constant 0.00255102036 : f32
    %217 = arith.mulf %216, %cst_73 : f32
    %218 = vector.broadcast %217 : f32 to vector<16x1xf32>
    %219 = arith.select %210, %218, %205 : vector<16x1xi1>, vector<16x1xf32>
    %c12_i32_74 = arith.constant 12 : i32
    %220 = vector.broadcast %c12_i32_74 : i32 to vector<16x1xi32>
    %221 = arith.cmpi sge, %14, %220 : vector<16x1xi32>
    %c14_i32_75 = arith.constant 14 : i32
    %222 = vector.broadcast %c14_i32_75 : i32 to vector<16x1xi32>
    %223 = arith.cmpi slt, %14, %222 : vector<16x1xi32>
    %224 = arith.andi %221, %223 : vector<16x1xi1>
    %cst_76 = arith.constant 0.000000e+00 : f32
    %225 = vector.broadcast %cst_76 : f32 to vector<16x1xf32>
    %226 = arith.select %224, %134, %225 : vector<16x1xi1>, vector<16x1xf32>
    %227 = vector.shape_cast %226 : vector<16x1xf32> to vector<1x16x1xf32>
    %cst_77 = arith.constant dense<0.000000e+00> : vector<1xf32>
    %228 = vector.multi_reduction <add>, %227, %cst_77 [1, 2] : vector<1x16x1xf32> to vector<1xf32>
    %229 = vector.shape_cast %228 : vector<1xf32> to vector<1x1x1xf32>
    %230 = vector.extract %229[0, 0, 0] : f32 from vector<1x1x1xf32>
    %cst_78 = arith.constant 0.00255102036 : f32
    %231 = arith.mulf %230, %cst_78 : f32
    %232 = vector.broadcast %231 : f32 to vector<16x1xf32>
    %233 = arith.select %224, %232, %219 : vector<16x1xi1>, vector<16x1xf32>
    %c14_i32_79 = arith.constant 14 : i32
    %234 = vector.broadcast %c14_i32_79 : i32 to vector<16x1xi32>
    %235 = arith.cmpi sge, %14, %234 : vector<16x1xi32>
    %c16_i32_80 = arith.constant 16 : i32
    %236 = vector.broadcast %c16_i32_80 : i32 to vector<16x1xi32>
    %237 = arith.cmpi slt, %14, %236 : vector<16x1xi32>
    %238 = arith.andi %235, %237 : vector<16x1xi1>
    %cst_81 = arith.constant 0.000000e+00 : f32
    %239 = vector.broadcast %cst_81 : f32 to vector<16x1xf32>
    %240 = arith.select %238, %134, %239 : vector<16x1xi1>, vector<16x1xf32>
    %241 = vector.shape_cast %240 : vector<16x1xf32> to vector<1x16x1xf32>
    %cst_82 = arith.constant dense<0.000000e+00> : vector<1xf32>
    %242 = vector.multi_reduction <add>, %241, %cst_82 [1, 2] : vector<1x16x1xf32> to vector<1xf32>
    %243 = vector.shape_cast %242 : vector<1xf32> to vector<1x1x1xf32>
    %244 = vector.extract %243[0, 0, 0] : f32 from vector<1x1x1xf32>
    %cst_83 = arith.constant 0.00255102036 : f32
    %245 = arith.mulf %244, %cst_83 : f32
    %246 = vector.broadcast %245 : f32 to vector<16x1xf32>
    %247 = arith.select %238, %246, %233 : vector<16x1xi1>, vector<16x1xf32>
    %cst_84 = arith.constant 9.99999974E-6 : f32
    %248 = vector.broadcast %cst_84 : f32 to vector<16x1xf32>
    %249 = arith.addf %247, %248 : vector<16x1xf32>
    %250 = math.rsqrt %249 : vector<16x1xf32>
    %c0_85 = arith.constant 0 : index
    %c1 = arith.constant 1 : index
    %251 = vector.load %arg3[%c0_85, %c1] : memref<16x3xf32, #tpu.memory_space<vmem>>, vector<16x1xf32>
    %252 = arith.mulf %250, %251 : vector<16x1xf32>
    %253 = vector.broadcast %252 : vector<16x1xf32> to vector<16x196xf32>
    %254 = arith.mulf %131, %253 : vector<16x196xf32>
    %c0_86 = arith.constant 0 : index
    %c2 = arith.constant 2 : index
    %255 = vector.load %arg3[%c0_86, %c2] : memref<16x3xf32, #tpu.memory_space<vmem>>, vector<16x1xf32>
    %256 = vector.broadcast %255 : vector<16x1xf32> to vector<16x196xf32>
    %257 = arith.addf %254, %256 : vector<16x196xf32>
    %c0_87 = arith.constant 0 : index
    %c0_88 = arith.constant 0 : index
    %c0_89 = arith.constant 0 : index
    %258 = vector.load %arg4[%c0_87, %c0_88, %c0_89] : memref<1x16x196xf32, #tpu.memory_space<vmem>>, vector<1x16x196xf32>
    %259 = vector.shape_cast %258 : vector<1x16x196xf32> to vector<16x196xf32>
    %260 = vector.shape_cast %257 : vector<16x196xf32> to vector<1x16x196xf32>
    tpu.vector_store %arg4[%c0_87, %c0_88, %c0_89], %260 {strides = array<i32>} : memref<1x16x196xf32, #tpu.memory_space<vmem>>, vector<1x16x196xf32>,
    return
  }
  func.func @transform_0(%arg0: i32) -> (i32, i32, i32) {
    %c0_i32 = arith.constant 0 : i32
    %c0_i32_0 = arith.constant 0 : i32
    %c0_i32_1 = arith.constant 0 : i32
    return %arg0, %c0_i32, %c0_i32_0 : i32, i32, i32
  }
  func.func @transform_1(%arg0: i32) -> (i32, i32) {
    %c0_i32 = arith.constant 0 : i32
    %c0_i32_0 = arith.constant 0 : i32
    %c0_i32_1 = arith.constant 0 : i32
    return %c0_i32, %c0_i32_0 : i32, i32
  }
  func.func @transform_2(%arg0: i32) -> (i32, i32) {
    %c0_i32 = arith.constant 0 : i32
    %c0_i32_0 = arith.constant 0 : i32
    %c0_i32_1 = arith.constant 0 : i32
    return %c0_i32, %c0_i32_0 : i32, i32
  }
  func.func @transform_3(%arg0: i32) -> (i32, i32, i32) {
    %c0_i32 = arith.constant 0 : i32
    %c0_i32_0 = arith.constant 0 : i32
    %c0_i32_1 = arith.constant 0 : i32
    return %arg0, %c0_i32, %c0_i32_0 : i32, i32, i32
  }
}

</mosaic_0001>

<llo_original>
// kernel: tpu_custom_call.1
$region0: #{tpu_custom_call.1}
  #allocation0 [shape = 'u32[]', space=smem, size = 0x4, offset = 0x4, fixed_abs, tag = 'smem constant byte address 0x4 - core index']
  #allocation1 [shape = 'u32[144,128]{1,0:T(1,128)}', space=vmem, size = 0x12000, scoped, tag = 'internal scratch']
  %s0 = inlined_call_operand.vmem [shape: f32[2,27,196], index: 0, kind: input, shape index: {}]
  %s1 = inlined_call_operand.vmem [shape: f32[16,27], index: 1, kind: input, shape index: {}]
  %s2 = inlined_call_operand.vmem [shape: f32[16,3], index: 2, kind: input, shape index: {}]
  %s3 = inlined_call_operand.hbm [shape: f32[2,16,196], index: 3, kind: output, shape index: {}]
  %s4 = sld [smem:[#allocation0]]
  $region45: #{tpu_custom_call.1} parent=0
    _
  %s6 = ssub.s32 1, %s4
  %s7 = scalar_select 0, %s6, %s4
  $region1: #{tpu_custom_call.1} parent=0
    #allocation2 [shape = 'u8[32768]{0}', space=vmem, size = 0x8000, scoped, tag = 'output window, operand 0']
    #allocation3 [shape = 's32[2]{0}', space=sflag, size = 0x8, scoped, tag = 'scoped memory for tpu_custom_call.1']
    %8 = vsyncpa [#allocation3], 0
    %s9 = scalar_lea.sflag [#allocation3], 1
    %10 = vsyncpa %s9, 0
    loop: start=0, step=1, limit=4
    $region2: #{tpu_custom_call.1} parent=1 // loop_pre_header
      _
    $region3: #{tpu_custom_call.1} parent=1 // loop_header
      %s12 = sphi 0, %s16
      %p13 = scmp.ge.s32.totalorder %s12, 4
      %s22 = sphi 0, %s24
      %s25 = sphi 0, %s22
      %s26 = sphi 0, %s25
      %s42 = sphi 0, %s26
      %s46 = sphi 0, %s46
      %s48 = sphi 0, %s46
      %s49 = sphi 0, %s48
      %s63 = sphi 0, %s49
      %s67 = sphi 0, %s67
      %s69 = sphi 0, %s67
      %s70 = sphi 0, %s69
      %s84 = sphi 0, %s70
      %s90 = sphi 0, %s92
      %s93 = sphi 0, %s90
      %s94 = sphi 0, %s93
      %s110 = sphi 0, %s94
    $region4: #{tpu_custom_call.1} parent=1 // loop_header_branch
      %15 = sbr.rel (%p13) target = $region8
    $region5: #{tpu_custom_call.1} parent=1 // loop_body
      %s17 = ssub.s32 %s12, 1
      %s18 = ssub.s32 %s12, 2
      %s19 = sadd.s32 %s12, 1
      %s20 = ssub.s32 %s12, %s19
      %p21 = scmp.eq.s32.totalorder %s20, 0
      %s23 = sadd.s32 %s22, 1
      %s24 = scalar_select %p21, %s22, %s23
      %p27 = pneg %p21
      %p28 = scmp.eq.s32.totalorder %s12, 1
      %p29 = por %p27, %p28
      %p30 = scmp.ne.s32.totalorder %s22, %s25
      %p31 = scmp.eq.s32.totalorder %s12, 0
      %p32 = por %p30, %p31
      %p33 = scmp.ne.s32.totalorder %s22, %s25
      %p34 = scmp.eq.s32.totalorder %s17, 1
      %p35 = por %p33, %p34
      %p36 = scmp.ne.s32.totalorder %s25, %s26
      %p37 = scmp.eq.s32.totalorder %s17, 0
      %p38 = por %p36, %p37
      %p39 = scmp.ne.s32.totalorder %s25, %s26
      %p40 = scmp.eq.s32.totalorder %s18, 1
      %p41 = por %p39, %p40
      %p43 = scmp.ne.s32.totalorder %s26, %s42
      %p44 = scmp.eq.s32.totalorder %s18, 0
      %p45 = por %p43, %p44
      %s47 = sadd.s32 %s46, 1
      %p50 = scmp.eq.s32.totalorder %s12, 1
      %p51 = scmp.ne.s32.totalorder %s46, %s48
      %p52 = scmp.eq.s32.totalorder %s12, 0
      %p53 = por %p51, %p52
      %p54 = scmp.ne.s32.totalorder %s46, %s48
      %p55 = scmp.eq.s32.totalorder %s17, 1
      %p56 = por %p54, %p55
      %p57 = scmp.ne.s32.totalorder %s48, %s49
      %p58 = scmp.eq.s32.totalorder %s17, 0
      %p59 = por %p57, %p58
      %p60 = scmp.ne.s32.totalorder %s48, %s49
      %p61 = scmp.eq.s32.totalorder %s18, 1
      %p62 = por %p60, %p61
      %p64 = scmp.ne.s32.totalorder %s49, %s63
      %p65 = scmp.eq.s32.totalorder %s18, 0
      %p66 = por %p64, %p65
      %s68 = sadd.s32 %s67, 1
      %p71 = scmp.eq.s32.totalorder %s12, 1
      %p72 = scmp.ne.s32.totalorder %s67, %s69
      %p73 = scmp.eq.s32.totalorder %s12, 0
      %p74 = por %p72, %p73
      %p75 = scmp.ne.s32.totalorder %s67, %s69
      %p76 = scmp.eq.s32.totalorder %s17, 1
      %p77 = por %p75, %p76
      %p78 = scmp.ne.s32.totalorder %s69, %s70
      %p79 = scmp.eq.s32.totalorder %s17, 0
      %p80 = por %p78, %p79
      %p81 = scmp.ne.s32.totalorder %s69, %s70
      %p82 = scmp.eq.s32.totalorder %s18, 1
      %p83 = por %p81, %p82
      %p85 = scmp.ne.s32.totalorder %s70, %s84
      %p86 = scmp.eq.s32.totalorder %s18, 0
      %p87 = por %p85, %p86
      %s88 = ssub.s32 %s12, %s19
      %p89 = scmp.eq.s32.totalorder %s88, 0
      %s91 = sadd.s32 %s90, 1
      %s92 = scalar_select %p89, %s90, %s91
      %p95 = pneg %p89
      %p96 = scmp.eq.s32.totalorder %s12, 1
      %p97 = por %p95, %p96
      %p98 = scmp.ne.s32.totalorder %s90, %s93
      %p99 = scmp.eq.s32.totalorder %s12, 0
      %p100 = por %p98, %p99
      %p101 = scmp.ne.s32.totalorder %s90, %s93
      %p102 = scmp.eq.s32.totalorder %s17, 1
      %p103 = por %p101, %p102
      %p104 = scmp.ne.s32.totalorder %s93, %s94
      %p105 = scmp.eq.s32.totalorder %s17, 0
      %p106 = por %p104, %p105
      %p107 = scmp.ne.s32.totalorder %s93, %s94
      %p108 = scmp.eq.s32.totalorder %s18, 1
      %p109 = por %p107, %p108
      %p111 = scmp.ne.s32.totalorder %s94, %s110
      %p112 = scmp.eq.s32.totalorder %s18, 0
      %p113 = por %p111, %p112
      %p114 = scmp.le.s32.totalorder 1, %s12
      %p115 = scmp.lt.s32.totalorder %s12, 3
      %p116 = pnand %p114, %p115
      %p117 = pneg %p116
      // Predicated region
      $region9: #{tpu_custom_call.1} parent=5 // pred_check
        _
      $region10: #{tpu_custom_call.1} parent=5 // pred_check_branch
        %119 = sbr.rel (%p116) target = $region12
      $region11: #{tpu_custom_call.1} parent=5 // pred_region
        %s120 = ssub.s32 %s12, 1
        // Predicated region
        $region13: #{tpu_custom_call.1} parent=11 // pred_check
          %p121 = pneg %p59
        $region14: #{tpu_custom_call.1} parent=11 // pred_check_branch
          %123 = sbr.rel (%p121) target = $region16
        $region15: #{tpu_custom_call.1} parent=11 // pred_region
          _
        $region16: #{tpu_custom_call.1} parent=11 // pred_fallthru
          _
        // Predicated region
        $region17: #{tpu_custom_call.1} parent=11 // pred_check
          %p124 = pneg %p80
        $region18: #{tpu_custom_call.1} parent=11 // pred_check_branch
          %126 = sbr.rel (%p124) target = $region20
        $region19: #{tpu_custom_call.1} parent=11 // pred_region
          _
        $region20: #{tpu_custom_call.1} parent=11 // pred_fallthru
          _
      $region12: #{tpu_custom_call.1} parent=5 // pred_fallthru
        _
      %p127 = scmp.lt.s32.totalorder %s12, 2
      // Predicated region
      $region21: #{tpu_custom_call.1} parent=5 // pred_check
        %p128 = pneg %p127
      $region22: #{tpu_custom_call.1} parent=5 // pred_check_branch
        %130 = sbr.rel (%p128) target = $region24
      $region23: #{tpu_custom_call.1} parent=5 // pred_region
        // Predicated region
        $region25: #{tpu_custom_call.1} parent=23 // pred_check
          %p131 = pneg %p32
        $region26: #{tpu_custom_call.1} parent=23 // pred_check_branch
          %133 = sbr.rel (%p131) target = $region28
        $region27: #{tpu_custom_call.1} parent=23 // pred_region
          %p134 = scmp.lt.s32.totalorder %s12, 1
          %s135 = scalar_select %p134, %s12, 1
          %s136 = smul.addr %s135, 8
          %s137 = smul.addr %s136, 8
          %s138 = scalar_lea.vmem %s0, %s137
        $region28: #{tpu_custom_call.1} parent=23 // pred_fallthru
          _
      $region24: #{tpu_custom_call.1} parent=5 // pred_fallthru
        _
      %p139 = scmp.le.s32.totalorder 1, %s12
      %p140 = scmp.lt.s32.totalorder %s12, 3
      %p141 = pnand %p139, %p140
      %p142 = pneg %p141
      // Predicated region
      $region29: #{tpu_custom_call.1} parent=5 // pred_check
        _
      $region30: #{tpu_custom_call.1} parent=5 // pred_check_branch
        %144 = sbr.rel (%p141) target = $region32
      $region31: #{tpu_custom_call.1} parent=5 // pred_region
        %s145 = ssub.s32 %s12, 1
        %p146 = scmp.lt.s32.totalorder %s17, 1
        %s147 = scalar_select %p146, %s17, 1
        %s148 = smul.addr %s147, 8
        %s149 = smul.addr %s148, 8
        %s150 = scalar_lea.vmem %s0, %s149
        %p151 = pneg %p38
        %p152 = pneg %p35
        %p153 = pneg %p59
        %p154 = pneg %p56
        %p155 = pneg %p80
        %p156 = pneg %p77
        %p157 = pneg %p106
        %p158 = pneg %p103
        %s159 = sand.u32 %s93, 1
        %s160 = scalar_lea.sflag [#allocation3], %s159
        %s161 = sand.u32 %s93, 1
        %s162 = smul.addr %s161, 32
        %s163 = scalar_lea.vmem [#allocation2], %s162
        %p164 = scmp.lt.s32.totalorder %s17, 1
        %s165 = scalar_select %p164, %s17, 1
        %s166 = smul.addr %s165, 8
        %s167 = smul.addr %s166, 8
        %s168 = scalar_lea.vmem %s0, %s167
        %v169 = vld [vmem:[%s1] sm:$0xff]
        %v170 = vld [vmem:[%s1 + $0x8] sm:$0xff]
        %v171 = vld [vmem:[%s168] sm:$0xff]
        %v172 = vld [vmem:[%s168 + $0x8] sm:$0xff]
        %v173 = vld [vmem:[%s168 + $0x10] sm:$0xff]
        %v174 = vld [vmem:[%s168 + $0x18] sm:$0xff]
        %v175 = vld [vmem:[%s168 + $0x20] sm:$0xff]
        %v176 = vld [vmem:[%s168 + $0x28] sm:$0xff]
        %v177 = vld [vmem:[%s168 + $0x30] sm:$0x7]
        %v178 = vld [vmem:[%s168 + $0x38] sm:$0x7]
        %v179 = vld [vmem:[%s2] sm:$0xff]
        %v180 = vld [vmem:[%s2 + $0x8] sm:$0xff]
        %182 = vset.pattern.permute.xlu0 0
        %183 = vperm.xlu0 %182, %v179
        %v184 = vpop.permute.xlu0 %183
        %187 = vset.pattern.permute.xlu0 0
        %188 = vperm.xlu0 %187, %v180
        %v189 = vpop.permute.xlu0 %188
        %vm191 = vcmask 220160
        %v193 = vsel %vm191, %v169, 0
        %v196 = vsel %vm191, %v170, 0
        %vm198 = vcmask 1042432
        %v200 = vsel %vm198, %v177, 0
        %v203 = vsel %vm198, %v178, 0
        %205 = vmatprep.subr.mxu0 0.0
        %206 = vmatpush1.msra.mxu0 0.0
        %207 = vmatprep.subr.mxu0 0.0
        %208 = vmatpush1.msra.mxu0 0.0
        %209 = vmatprep.subr.mxu0 0.0
        %210 = vmatpush1.msra.mxu0 0.0
        %211 = vmatprep.subr.mxu0 0.0
        %212 = vmatpush1.msra.mxu0 0.0
        %213 = vmatprep.subr.mxu0 0.0
        %214 = vmatpush1.msra.mxu0 0.0
        %215 = vmatprep.subr.mxu0 0.0
        %216 = vmatpush1.msra.mxu0 0.0
        %217 = vmatprep.subr.mxu0 0.0
        %218 = vmatpush1.msra.mxu0 0.0
        %219 = vmatprep.subr.mxu0 0.0
        %220 = vmatpush1.msra.mxu0 0.0
        %221 = vmatprep.subr.mxu0 0.0
        %222 = vmatpush1.msra.mxu0 0.0
        %223 = vmatprep.subr.mxu0 0.0
        %224 = vmatpush1.msra.mxu0 0.0
        %225 = vmatprep.subr.mxu0 0.0
        %226 = vmatpush1.msra.mxu0 0.0
        %227 = vmatprep.subr.mxu0 0.0
        %228 = vmatpush1.msra.mxu0 0.0
        %v229 = vand.u32 %v203, 4294901760
        %230 = vmatprep.subr.mxu0 %v229
        %v231 = vand.u32 %v200, 4294901760
        %232 = vmatpush1.msra.mxu0 %v231
        %v233 = vand.u32 %v176, 4294901760
        %234 = vmatprep.subr.mxu0 %v233
        %v235 = vand.u32 %v175, 4294901760
        %236 = vmatpush1.msra.mxu0 %v235
        %v237 = vand.u32 %v174, 4294901760
        %238 = vmatprep.subr.mxu0 %v237
        %v239 = vand.u32 %v173, 4294901760
        %240 = vmatpush1.msra.mxu0 %v239
        %v241 = vand.u32 %v172, 4294901760
        %242 = vmatprep.subr.mxu0 %v241
        %v243 = vand.u32 %v171, 4294901760
        %244 = vmatpush1.msra.mxu0 %v243
        %245 = vmatprep.subr.mxu0 0.0
        %246 = vmatpush2.msra.mxu0 0.0
        %247 = vmatprep.subr.mxu0 0.0
        %248 = vmatpush2.msra.mxu0 0.0
        %249 = vmatprep.subr.mxu0 0.0
        %250 = vmatpush2.msra.mxu0 0.0
        %251 = vmatprep.subr.mxu0 0.0
        %252 = vmatpush2.msra.mxu0 0.0
        %253 = vmatprep.subr.mxu0 0.0
        %254 = vmatpush2.msra.mxu0 0.0
        %255 = vmatprep.subr.mxu0 0.0
        %256 = vmatpush2.msra.mxu0 0.0
        %257 = vmatprep.subr.mxu0 0.0
        %258 = vmatpush2.msra.mxu0 0.0
        %259 = vmatprep.subr.mxu0 0.0
        %260 = vmatpush2.msra.mxu0 0.0
        %261 = vmatprep.subr.mxu0 0.0
        %262 = vmatpush2.msra.mxu0 0.0
        %263 = vmatprep.subr.mxu0 0.0
        %264 = vmatpush2.msra.mxu0 0.0
        %265 = vmatprep.subr.mxu0 0.0
        %266 = vmatpush2.msra.mxu0 0.0
        %267 = vmatprep.subr.mxu0 0.0
        %268 = vmatpush2.msra.mxu0 0.0
        %269 = vmatprep.subr.mxu0 0.0
        %270 = vmatpush2.msra.mxu0 0.0
        %271 = vmatprep.subr.mxu0 0.0
        %272 = vmatpush2.msra.mxu0 0.0
        %273 = vmatprep.subr.mxu0 0.0
        %274 = vmatpush2.msra.mxu0 0.0
        %275 = vmatprep.subr.mxu0 0.0
        %276 = vmatpush2.msra.mxu0 0.0
        %277 = vmatprep.mubr.f32.mxu0 0.0
        %v278 = vand.u32 %v193, 4294901760
        %v279 = vsub.f32 %v193, %v278
        %v280 = vand.u32 %v279, 4294901760
        %v281 = vsub.f32 %v279, %v280
        %v282 = vand.u32 %v281, 4294901760
        %283 = vmatmul.mubr.f32.gmra.mxu0 %v282
        %v284 = vpop.f32.mrf.mxu0
        %v285 = vadd.f32 %v184, %v284
        %v286 = vpop.f32.mrf.mxu0
        %v287 = vadd.f32 %v184, %v286
        %288 = vmatprep.mubr.f32.mxu0 0.0
        %v289 = vand.u32 %v196, 4294901760
        %v290 = vsub.f32 %v196, %v289
        %v291 = vand.u32 %v290, 4294901760
        %v292 = vsub.f32 %v290, %v291
        %v293 = vand.u32 %v292, 4294901760
        %294 = vmatmul.mubr.f32.gmra.mxu0 %v293
        %v295 = vpop.f32.mrf.mxu0
        %v296 = vadd.f32 %v189, %v295
        %v297 = vpop.f32.mrf.mxu0
        %v298 = vadd.f32 %v189, %v297
        %299 = vdwg.mxu0
        %300 = vmatprep.subr.mxu0 0.0
        %301 = vmatpush1.msra.mxu0 0.0
        %302 = vmatprep.subr.mxu0 0.0
        %303 = vmatpush1.msra.mxu0 0.0
        %304 = vmatprep.subr.mxu0 0.0
        %305 = vmatpush1.msra.mxu0 0.0
        %306 = vmatprep.subr.mxu0 0.0
        %307 = vmatpush1.msra.mxu0 0.0
        %308 = vmatprep.subr.mxu0 0.0
        %309 = vmatpush1.msra.mxu0 0.0
        %310 = vmatprep.subr.mxu0 0.0
        %311 = vmatpush1.msra.mxu0 0.0
        %312 = vmatprep.subr.mxu0 0.0
        %313 = vmatpush1.msra.mxu0 0.0
        %314 = vmatprep.subr.mxu0 0.0
        %315 = vmatpush1.msra.mxu0 0.0
        %316 = vmatprep.subr.mxu0 0.0
        %317 = vmatpush1.msra.mxu0 0.0
        %318 = vmatprep.subr.mxu0 0.0
        %319 = vmatpush1.msra.mxu0 0.0
        %320 = vmatprep.subr.mxu0 0.0
        %321 = vmatpush1.msra.mxu0 0.0
        %322 = vmatprep.subr.mxu0 0.0
        %323 = vmatpush1.msra.mxu0 0.0
        %v324 = vand.u32 %v203, 4294901760
        %v325 = vsub.f32 %v203, %v324
        %v326 = vand.u32 %v325, 4294901760
        %v327 = vsub.f32 %v325, %v326
        %v328 = vand.u32 %v327, 4294901760
        %329 = vmatprep.subr.mxu0 %v328
        %v330 = vand.u32 %v200, 4294901760
        %v331 = vsub.f32 %v200, %v330
        %v332 = vand.u32 %v331, 4294901760
        %v333 = vsub.f32 %v331, %v332
        %v334 = vand.u32 %v333, 4294901760
        %335 = vmatpush1.msra.mxu0 %v334
        %v336 = vand.u32 %v176, 4294901760
        %v337 = vsub.f32 %v176, %v336
        %v338 = vand.u32 %v337, 4294901760
        %v339 = vsub.f32 %v337, %v338
        %v340 = vand.u32 %v339, 4294901760
        %341 = vmatprep.subr.mxu0 %v340
        %v342 = vand.u32 %v175, 4294901760
        %v343 = vsub.f32 %v175, %v342
        %v344 = vand.u32 %v343, 4294901760
        %v345 = vsub.f32 %v343, %v344
        %v346 = vand.u32 %v345, 4294901760
        %347 = vmatpush1.msra.mxu0 %v346
        %v348 = vand.u32 %v174, 4294901760
        %v349 = vsub.f32 %v174, %v348
        %v350 = vand.u32 %v349, 4294901760
        %v351 = vsub.f32 %v349, %v350
        %v352 = vand.u32 %v351, 4294901760
        %353 = vmatprep.subr.mxu0 %v352
        %v354 = vand.u32 %v173, 4294901760
        %v355 = vsub.f32 %v173, %v354
        %v356 = vand.u32 %v355, 4294901760
        %v357 = vsub.f32 %v355, %v356
        %v358 = vand.u32 %v357, 4294901760
        %359 = vmatpush1.msra.mxu0 %v358
        %v360 = vand.u32 %v172, 4294901760
        %v361 = vsub.f32 %v172, %v360
        %v362 = vand.u32 %v361, 4294901760
        %v363 = vsub.f32 %v361, %v362
        %v364 = vand.u32 %v363, 4294901760
        %365 = vmatprep.subr.mxu0 %v364
        %v366 = vand.u32 %v171, 4294901760
        %v367 = vsub.f32 %v171, %v366
        %v368 = vand.u32 %v367, 4294901760
        %v369 = vsub.f32 %v367, %v368
        %v370 = vand.u32 %v369, 4294901760
        %371 = vmatpush1.msra.mxu0 %v370
        %372 = vmatprep.subr.mxu0 0.0
        %373 = vmatpush2.msra.mxu0 0.0
        %374 = vmatprep.subr.mxu0 0.0
        %375 = vmatpush2.msra.mxu0 0.0
        %376 = vmatprep.subr.mxu0 0.0
        %377 = vmatpush2.msra.mxu0 0.0
        %378 = vmatprep.subr.mxu0 0.0
        %379 = vmatpush2.msra.mxu0 0.0
        %380 = vmatprep.subr.mxu0 0.0
        %381 = vmatpush2.msra.mxu0 0.0
        %382 = vmatprep.subr.mxu0 0.0
        %383 = vmatpush2.msra.mxu0 0.0
        %384 = vmatprep.subr.mxu0 0.0
        %385 = vmatpush2.msra.mxu0 0.0
        %386 = vmatprep.subr.mxu0 0.0
        %387 = vmatpush2.msra.mxu0 0.0
        %388 = vmatprep.subr.mxu0 0.0
        %389 = vmatpush2.msra.mxu0 0.0
        %390 = vmatprep.subr.mxu0 0.0
        %391 = vmatpush2.msra.mxu0 0.0
        %392 = vmatprep.subr.mxu0 0.0
        %393 = vmatpush2.msra.mxu0 0.0
        %394 = vmatprep.subr.mxu0 0.0
        %395 = vmatpush2.msra.mxu0 0.0
        %396 = vmatprep.subr.mxu0 0.0
        %397 = vmatpush2.msra.mxu0 0.0
        %398 = vmatprep.subr.mxu0 0.0
        %399 = vmatpush2.msra.mxu0 0.0
        %400 = vmatprep.subr.mxu0 0.0
        %401 = vmatpush2.msra.mxu0 0.0
        %402 = vmatprep.subr.mxu0 0.0
        %403 = vmatpush2.msra.mxu0 0.0
        %404 = vmatprep.mubr.f32.mxu0 0.0
        %v405 = vand.u32 %v193, 4294901760
        %406 = vmatmul.mubr.f32.gmra.mxu0 %v405
        %v407 = vpop.f32.mrf.mxu0
        %v408 = vadd.f32 %v285, %v407
        %v409 = vpop.f32.mrf.mxu0
        %v410 = vadd.f32 %v287, %v409
        %411 = vmatprep.mubr.f32.mxu0 0.0
        %v412 = vand.u32 %v196, 4294901760
        %413 = vmatmul.mubr.f32.gmra.mxu0 %v412
        %v414 = vpop.f32.mrf.mxu0
        %v415 = vadd.f32 %v296, %v414
        %v416 = vpop.f32.mrf.mxu0
        %v417 = vadd.f32 %v298, %v416
        %418 = vdwg.mxu0
        %419 = vmatprep.subr.mxu0 0.0
        %420 = vmatpush1.msra.mxu0 0.0
        %421 = vmatprep.subr.mxu0 0.0
        %422 = vmatpush1.msra.mxu0 0.0
        %423 = vmatprep.subr.mxu0 0.0
        %424 = vmatpush1.msra.mxu0 0.0
        %425 = vmatprep.subr.mxu0 0.0
        %426 = vmatpush1.msra.mxu0 0.0
        %427 = vmatprep.subr.mxu0 0.0
        %428 = vmatpush1.msra.mxu0 0.0
        %429 = vmatprep.subr.mxu0 0.0
        %430 = vmatpush1.msra.mxu0 0.0
        %431 = vmatprep.subr.mxu0 0.0
        %432 = vmatpush1.msra.mxu0 0.0
        %433 = vmatprep.subr.mxu0 0.0
        %434 = vmatpush1.msra.mxu0 0.0
        %435 = vmatprep.subr.mxu0 0.0
        %436 = vmatpush1.msra.mxu0 0.0
        %437 = vmatprep.subr.mxu0 0.0
        %438 = vmatpush1.msra.mxu0 0.0
        %439 = vmatprep.subr.mxu0 0.0
        %440 = vmatpush1.msra.mxu0 0.0
        %441 = vmatprep.subr.mxu0 0.0
        %442 = vmatpush1.msra.mxu0 0.0
        %v443 = vand.u32 %v203, 4294901760
        %v444 = vsub.f32 %v203, %v443
        %445 = vmatprep.subr.mxu0 %v444
        %v446 = vand.u32 %v200, 4294901760
        %v447 = vsub.f32 %v200, %v446
        %448 = vmatpush1.msra.mxu0 %v447
        %v449 = vand.u32 %v176, 4294901760
        %v450 = vsub.f32 %v176, %v449
        %451 = vmatprep.subr.mxu0 %v450
        %v452 = vand.u32 %v175, 4294901760
        %v453 = vsub.f32 %v175, %v452
        %454 = vmatpush1.msra.mxu0 %v453
        %v455 = vand.u32 %v174, 4294901760
        %v456 = vsub.f32 %v174, %v455
        %457 = vmatprep.subr.mxu0 %v456
        %v458 = vand.u32 %v173, 4294901760
        %v459 = vsub.f32 %v173, %v458
        %460 = vmatpush1.msra.mxu0 %v459
        %v461 = vand.u32 %v172, 4294901760
        %v462 = vsub.f32 %v172, %v461
        %463 = vmatprep.subr.mxu0 %v462
        %v464 = vand.u32 %v171, 4294901760
        %v465 = vsub.f32 %v171, %v464
        %466 = vmatpush1.msra.mxu0 %v465
        %467 = vmatprep.subr.mxu0 0.0
        %468 = vmatpush2.msra.mxu0 0.0
        %469 = vmatprep.subr.mxu0 0.0
        %470 = vmatpush2.msra.mxu0 0.0
        %471 = vmatprep.subr.mxu0 0.0
        %472 = vmatpush2.msra.mxu0 0.0
        %473 = vmatprep.subr.mxu0 0.0
        %474 = vmatpush2.msra.mxu0 0.0
        %475 = vmatprep.subr.mxu0 0.0
        %476 = vmatpush2.msra.mxu0 0.0
        %477 = vmatprep.subr.mxu0 0.0
        %478 = vmatpush2.msra.mxu0 0.0
        %479 = vmatprep.subr.mxu0 0.0
        %480 = vmatpush2.msra.mxu0 0.0
        %481 = vmatprep.subr.mxu0 0.0
        %482 = vmatpush2.msra.mxu0 0.0
        %483 = vmatprep.subr.mxu0 0.0
        %484 = vmatpush2.msra.mxu0 0.0
        %485 = vmatprep.subr.mxu0 0.0
        %486 = vmatpush2.msra.mxu0 0.0
        %487 = vmatprep.subr.mxu0 0.0
        %488 = vmatpush2.msra.mxu0 0.0
        %489 = vmatprep.subr.mxu0 0.0
        %490 = vmatpush2.msra.mxu0 0.0
        %491 = vmatprep.subr.mxu0 0.0
        %492 = vmatpush2.msra.mxu0 0.0
        %493 = vmatprep.subr.mxu0 0.0
        %494 = vmatpush2.msra.mxu0 0.0
        %495 = vmatprep.subr.mxu0 0.0
        %496 = vmatpush2.msra.mxu0 0.0
        %497 = vmatprep.subr.mxu0 0.0
        %498 = vmatpush2.msra.mxu0 0.0
        %499 = vmatprep.mubr.f32.mxu0 0.0
        %v500 = vand.u32 %v193, 4294901760
        %v501 = vsub.f32 %v193, %v500
        %502 = vmatmul.mubr.f32.gmra.mxu0 %v501
        %v503 = vpop.f32.mrf.mxu0
        %v504 = vadd.f32 %v408, %v503
        %v505 = vpop.f32.mrf.mxu0
        %v506 = vadd.f32 %v410, %v505
        %507 = vmatprep.mubr.f32.mxu0 0.0
        %v508 = vand.u32 %v196, 4294901760
        %v509 = vsub.f32 %v196, %v508
        %510 = vmatmul.mubr.f32.gmra.mxu0 %v509
        %v511 = vpop.f32.mrf.mxu0
        %v512 = vadd.f32 %v415, %v511
        %v513 = vpop.f32.mrf.mxu0
        %v514 = vadd.f32 %v417, %v513
        %515 = vdwg.mxu0
        %516 = vmatprep.subr.mxu0 0.0
        %517 = vmatpush1.msra.mxu0 0.0
        %518 = vmatprep.subr.mxu0 0.0
        %519 = vmatpush1.msra.mxu0 0.0
        %520 = vmatprep.subr.mxu0 0.0
        %521 = vmatpush1.msra.mxu0 0.0
        %522 = vmatprep.subr.mxu0 0.0
        %523 = vmatpush1.msra.mxu0 0.0
        %524 = vmatprep.subr.mxu0 0.0
        %525 = vmatpush1.msra.mxu0 0.0
        %526 = vmatprep.subr.mxu0 0.0
        %527 = vmatpush1.msra.mxu0 0.0
        %528 = vmatprep.subr.mxu0 0.0
        %529 = vmatpush1.msra.mxu0 0.0
        %530 = vmatprep.subr.mxu0 0.0
        %531 = vmatpush1.msra.mxu0 0.0
        %532 = vmatprep.subr.mxu0 0.0
        %533 = vmatpush1.msra.mxu0 0.0
        %534 = vmatprep.subr.mxu0 0.0
        %535 = vmatpush1.msra.mxu0 0.0
        %536 = vmatprep.subr.mxu0 0.0
        %537 = vmatpush1.msra.mxu0 0.0
        %538 = vmatprep.subr.mxu0 0.0
        %539 = vmatpush1.msra.mxu0 0.0
        %v540 = vand.u32 %v203, 4294901760
        %541 = vmatprep.subr.mxu0 %v540
        %v542 = vand.u32 %v200, 4294901760
        %543 = vmatpush1.msra.mxu0 %v542
        %v544 = vand.u32 %v176, 4294901760
        %545 = vmatprep.subr.mxu0 %v544
        %v546 = vand.u32 %v175, 4294901760
        %547 = vmatpush1.msra.mxu0 %v546
        %v548 = vand.u32 %v174, 4294901760
        %549 = vmatprep.subr.mxu0 %v548
        %v550 = vand.u32 %v173, 4294901760
        %551 = vmatpush1.msra.mxu0 %v550
        %v552 = vand.u32 %v172, 4294901760
        %553 = vmatprep.subr.mxu0 %v552
        %v554 = vand.u32 %v171, 4294901760
        %555 = vmatpush1.msra.mxu0 %v554
        %556 = vmatprep.subr.mxu0 0.0
        %557 = vmatpush2.msra.mxu0 0.0
        %558 = vmatprep.subr.mxu0 0.0
        %559 = vmatpush2.msra.mxu0 0.0
        %560 = vmatprep.subr.mxu0 0.0
        %561 = vmatpush2.msra.mxu0 0.0
        %562 = vmatprep.subr.mxu0 0.0
        %563 = vmatpush2.msra.mxu0 0.0
        %564 = vmatprep.subr.mxu0 0.0
        %565 = vmatpush2.msra.mxu0 0.0
        %566 = vmatprep.subr.mxu0 0.0
        %567 = vmatpush2.msra.mxu0 0.0
        %568 = vmatprep.subr.mxu0 0.0
        %569 = vmatpush2.msra.mxu0 0.0
        %570 = vmatprep.subr.mxu0 0.0
        %571 = vmatpush2.msra.mxu0 0.0
        %572 = vmatprep.subr.mxu0 0.0
        %573 = vmatpush2.msra.mxu0 0.0
        %574 = vmatprep.subr.mxu0 0.0
        %575 = vmatpush2.msra.mxu0 0.0
        %576 = vmatprep.subr.mxu0 0.0
        %577 = vmatpush2.msra.mxu0 0.0
        %578 = vmatprep.subr.mxu0 0.0
        %579 = vmatpush2.msra.mxu0 0.0
        %580 = vmatprep.subr.mxu0 0.0
        %581 = vmatpush2.msra.mxu0 0.0
        %582 = vmatprep.subr.mxu0 0.0
        %583 = vmatpush2.msra.mxu0 0.0
        %584 = vmatprep.subr.mxu0 0.0
        %585 = vmatpush2.msra.mxu0 0.0
        %586 = vmatprep.subr.mxu0 0.0
        %587 = vmatpush2.msra.mxu0 0.0
        %588 = vmatprep.mubr.f32.mxu0 0.0
        %v589 = vand.u32 %v193, 4294901760
        %v590 = vsub.f32 %v193, %v589
        %v591 = vand.u32 %v590, 4294901760
        %592 = vmatmul.mubr.f32.gmra.mxu0 %v591
        %v593 = vpop.f32.mrf.mxu0
        %v594 = vadd.f32 %v504, %v593
        %v595 = vpop.f32.mrf.mxu0
        %v596 = vadd.f32 %v506, %v595
        %597 = vmatprep.mubr.f32.mxu0 0.0
        %v598 = vand.u32 %v196, 4294901760
        %v599 = vsub.f32 %v196, %v598
        %v600 = vand.u32 %v599, 4294901760
        %601 = vmatmul.mubr.f32.gmra.mxu0 %v600
        %v602 = vpop.f32.mrf.mxu0
        %v603 = vadd.f32 %v512, %v602
        %v604 = vpop.f32.mrf.mxu0
        %v605 = vadd.f32 %v514, %v604
        %606 = vdwg.mxu0
        %607 = vmatprep.subr.mxu0 0.0
        %608 = vmatpush1.msra.mxu0 0.0
        %609 = vmatprep.subr.mxu0 0.0
        %610 = vmatpush1.msra.mxu0 0.0
        %611 = vmatprep.subr.mxu0 0.0
        %612 = vmatpush1.msra.mxu0 0.0
        %613 = vmatprep.subr.mxu0 0.0
        %614 = vmatpush1.msra.mxu0 0.0
        %615 = vmatprep.subr.mxu0 0.0
        %616 = vmatpush1.msra.mxu0 0.0
        %617 = vmatprep.subr.mxu0 0.0
        %618 = vmatpush1.msra.mxu0 0.0
        %619 = vmatprep.subr.mxu0 0.0
        %620 = vmatpush1.msra.mxu0 0.0
        %621 = vmatprep.subr.mxu0 0.0
        %622 = vmatpush1.msra.mxu0 0.0
        %623 = vmatprep.subr.mxu0 0.0
        %624 = vmatpush1.msra.mxu0 0.0
        %625 = vmatprep.subr.mxu0 0.0
        %626 = vmatpush1.msra.mxu0 0.0
        %627 = vmatprep.subr.mxu0 0.0
        %628 = vmatpush1.msra.mxu0 0.0
        %629 = vmatprep.subr.mxu0 0.0
        %630 = vmatpush1.msra.mxu0 0.0
        %v631 = vand.u32 %v203, 4294901760
        %v632 = vsub.f32 %v203, %v631
        %v633 = vand.u32 %v632, 4294901760
        %634 = vmatprep.subr.mxu0 %v633
        %v635 = vand.u32 %v200, 4294901760
        %v636 = vsub.f32 %v200, %v635
        %v637 = vand.u32 %v636, 4294901760
        %638 = vmatpush1.msra.mxu0 %v637
        %v639 = vand.u32 %v176, 4294901760
        %v640 = vsub.f32 %v176, %v639
        %v641 = vand.u32 %v640, 4294901760
        %642 = vmatprep.subr.mxu0 %v641
        %v643 = vand.u32 %v175, 4294901760
        %v644 = vsub.f32 %v175, %v643
        %v645 = vand.u32 %v644, 4294901760
        %646 = vmatpush1.msra.mxu0 %v645
        %v647 = vand.u32 %v174, 4294901760
        %v648 = vsub.f32 %v174, %v647
        %v649 = vand.u32 %v648, 4294901760
        %650 = vmatprep.subr.mxu0 %v649
        %v651 = vand.u32 %v173, 4294901760
        %v652 = vsub.f32 %v173, %v651
        %v653 = vand.u32 %v652, 4294901760
        %654 = vmatpush1.msra.mxu0 %v653
        %v655 = vand.u32 %v172, 4294901760
        %v656 = vsub.f32 %v172, %v655
        %v657 = vand.u32 %v656, 4294901760
        %658 = vmatprep.subr.mxu0 %v657
        %v659 = vand.u32 %v171, 4294901760
        %v660 = vsub.f32 %v171, %v659
        %v661 = vand.u32 %v660, 4294901760
        %662 = vmatpush1.msra.mxu0 %v661
        %663 = vmatprep.subr.mxu0 0.0
        %664 = vmatpush2.msra.mxu0 0.0
        %665 = vmatprep.subr.mxu0 0.0
        %666 = vmatpush2.msra.mxu0 0.0
        %667 = vmatprep.subr.mxu0 0.0
        %668 = vmatpush2.msra.mxu0 0.0
        %669 = vmatprep.subr.mxu0 0.0
        %670 = vmatpush2.msra.mxu0 0.0
        %671 = vmatprep.subr.mxu0 0.0
        %672 = vmatpush2.msra.mxu0 0.0
        %673 = vmatprep.subr.mxu0 0.0
        %674 = vmatpush2.msra.mxu0 0.0
        %675 = vmatprep.subr.mxu0 0.0
        %676 = vmatpush2.msra.mxu0 0.0
        %677 = vmatprep.subr.mxu0 0.0
        %678 = vmatpush2.msra.mxu0 0.0
        %679 = vmatprep.subr.mxu0 0.0
        %680 = vmatpush2.msra.mxu0 0.0
        %681 = vmatprep.subr.mxu0 0.0
        %682 = vmatpush2.msra.mxu0 0.0
        %683 = vmatprep.subr.mxu0 0.0
        %684 = vmatpush2.msra.mxu0 0.0
        %685 = vmatprep.subr.mxu0 0.0
        %686 = vmatpush2.msra.mxu0 0.0
        %687 = vmatprep.subr.mxu0 0.0
        %688 = vmatpush2.msra.mxu0 0.0
        %689 = vmatprep.subr.mxu0 0.0
        %690 = vmatpush2.msra.mxu0 0.0
        %691 = vmatprep.subr.mxu0 0.0
        %692 = vmatpush2.msra.mxu0 0.0
        %693 = vmatprep.subr.mxu0 0.0
        %694 = vmatpush2.msra.mxu0 0.0
        %695 = vmatprep.mubr.f32.mxu0 0.0
        %v696 = vand.u32 %v193, 4294901760
        %697 = vmatmul.mubr.f32.gmra.mxu0 %v696
        %v698 = vpop.f32.mrf.mxu0
        %v699 = vadd.f32 %v594, %v698
        %v700 = vpop.f32.mrf.mxu0
        %v701 = vadd.f32 %v596, %v700
        %702 = vmatprep.mubr.f32.mxu0 0.0
        %v703 = vand.u32 %v196, 4294901760
        %704 = vmatmul.mubr.f32.gmra.mxu0 %v703
        %v705 = vpop.f32.mrf.mxu0
        %v706 = vadd.f32 %v603, %v705
        %v707 = vpop.f32.mrf.mxu0
        %v708 = vadd.f32 %v605, %v707
        %709 = vdwg.mxu0
        %710 = vmatprep.subr.mxu0 0.0
        %711 = vmatpush1.msra.mxu0 0.0
        %712 = vmatprep.subr.mxu0 0.0
        %713 = vmatpush1.msra.mxu0 0.0
        %714 = vmatprep.subr.mxu0 0.0
        %715 = vmatpush1.msra.mxu0 0.0
        %716 = vmatprep.subr.mxu0 0.0
        %717 = vmatpush1.msra.mxu0 0.0
        %718 = vmatprep.subr.mxu0 0.0
        %719 = vmatpush1.msra.mxu0 0.0
        %720 = vmatprep.subr.mxu0 0.0
        %721 = vmatpush1.msra.mxu0 0.0
        %722 = vmatprep.subr.mxu0 0.0
        %723 = vmatpush1.msra.mxu0 0.0
        %724 = vmatprep.subr.mxu0 0.0
        %725 = vmatpush1.msra.mxu0 0.0
        %726 = vmatprep.subr.mxu0 0.0
        %727 = vmatpush1.msra.mxu0 0.0
        %728 = vmatprep.subr.mxu0 0.0
        %729 = vmatpush1.msra.mxu0 0.0
        %730 = vmatprep.subr.mxu0 0.0
        %731 = vmatpush1.msra.mxu0 0.0
        %732 = vmatprep.subr.mxu0 0.0
        %733 = vmatpush1.msra.mxu0 0.0
        %v734 = vand.u32 %v203, 4294901760
        %735 = vmatprep.subr.mxu0 %v734
        %v736 = vand.u32 %v200, 4294901760
        %737 = vmatpush1.msra.mxu0 %v736
        %v738 = vand.u32 %v176, 4294901760
        %739 = vmatprep.subr.mxu0 %v738
        %v740 = vand.u32 %v175, 4294901760
        %741 = vmatpush1.msra.mxu0 %v740
        %v742 = vand.u32 %v174, 4294901760
        %743 = vmatprep.subr.mxu0 %v742
        %v744 = vand.u32 %v173, 4294901760
        %745 = vmatpush1.msra.mxu0 %v744
        %v746 = vand.u32 %v172, 4294901760
        %747 = vmatprep.subr.mxu0 %v746
        %v748 = vand.u32 %v171, 4294901760
        %749 = vmatpush1.msra.mxu0 %v748
        %750 = vmatprep.subr.mxu0 0.0
        %751 = vmatpush2.msra.mxu0 0.0
        %752 = vmatprep.subr.mxu0 0.0
        %753 = vmatpush2.msra.mxu0 0.0
        %754 = vmatprep.subr.mxu0 0.0
        %755 = vmatpush2.msra.mxu0 0.0
        %756 = vmatprep.subr.mxu0 0.0
        %757 = vmatpush2.msra.mxu0 0.0
        %758 = vmatprep.subr.mxu0 0.0
        %759 = vmatpush2.msra.mxu0 0.0
        %760 = vmatprep.subr.mxu0 0.0
        %761 = vmatpush2.msra.mxu0 0.0
        %762 = vmatprep.subr.mxu0 0.0
        %763 = vmatpush2.msra.mxu0 0.0
        %764 = vmatprep.subr.mxu0 0.0
        %765 = vmatpush2.msra.mxu0 0.0
        %766 = vmatprep.subr.mxu0 0.0
        %767 = vmatpush2.msra.mxu0 0.0
        %768 = vmatprep.subr.mxu0 0.0
        %769 = vmatpush2.msra.mxu0 0.0
        %770 = vmatprep.subr.mxu0 0.0
        %771 = vmatpush2.msra.mxu0 0.0
        %772 = vmatprep.subr.mxu0 0.0
        %773 = vmatpush2.msra.mxu0 0.0
        %774 = vmatprep.subr.mxu0 0.0
        %775 = vmatpush2.msra.mxu0 0.0
        %776 = vmatprep.subr.mxu0 0.0
        %777 = vmatpush2.msra.mxu0 0.0
        %778 = vmatprep.subr.mxu0 0.0
        %779 = vmatpush2.msra.mxu0 0.0
        %780 = vmatprep.subr.mxu0 0.0
        %781 = vmatpush2.msra.mxu0 0.0
        %782 = vmatprep.mubr.f32.mxu0 0.0
        %v783 = vand.u32 %v193, 4294901760
        %784 = vmatmul.mubr.f32.gmra.mxu0 %v783
        %v785 = vpop.f32.mrf.mxu0
        %v786 = vadd.f32 %v699, %v785
        %v787 = vpop.f32.mrf.mxu0
        %v788 = vadd.f32 %v701, %v787
        %789 = vmatprep.mubr.f32.mxu0 0.0
        %v790 = vand.u32 %v196, 4294901760
        %791 = vmatmul.mubr.f32.gmra.mxu0 %v790
        %v792 = vpop.f32.mrf.mxu0
        %v793 = vadd.f32 %v706, %v792
        %v794 = vpop.f32.mrf.mxu0
        %v795 = vadd.f32 %v708, %v794
        %796 = vdwg.mxu0
        %v797 = vsub.f32 0.0, %v786
        %v798 = vsub.f32 0.0, %v788
        %v799 = vsub.f32 0.0, %v793
        %v800 = vsub.f32 0.0, %v795
        %v801 = vmul.f32 %v797, 1.442695
        %v802 = vpow.pop %v801
        %v803 = vmul.f32 %v798, 1.442695
        %v804 = vpow.pop %v803
        %v805 = vmul.f32 %v799, 1.442695
        %v806 = vpow.pop %v805
        %v807 = vmul.f32 %v800, 1.442695
        %v808 = vpow.pop %v807
        %v809 = vadd.f32 %v802, 1.0
        %v810 = vadd.f32 %v804, 1.0
        %v811 = vadd.f32 %v806, 1.0
        %v812 = vadd.f32 %v808, 1.0
        %v813 = vrcp.pop %v809
        %v814 = vmul.f32 1.0, %v813
        %v815 = vrcp.pop %v810
        %v816 = vmul.f32 1.0, %v815
        %v817 = vrcp.pop %v811
        %v818 = vmul.f32 1.0, %v817
        %v819 = vrcp.pop %v812
        %v820 = vmul.f32 1.0, %v819
        %v821 = vlaneseq
        %v822 = vshrl.u32 %v821, 7
        %v823 = vadd.s32 %v822, 8
        %vm824 = vcmask 556032
        %v825 = vsel %vm824, %v816, 0.0
        %v826 = vadd.f32 %v814, %v825
        %827 = vadd.xlane.f32.xlu0 %v826
        %v828 = vpop.xlane.xlu0 %827
        %v829 = vsel %vm824, %v820, 0.0
        %v830 = vadd.f32 %v818, %v829
        %831 = vadd.xlane.f32.xlu0 %v830
        %v832 = vpop.xlane.xlu0 %831
        %vm833 = vcmp.ge.s32.totalorder %v822, 0
        %vm834 = vcmp.ge.s32.totalorder %v823, 0
        %vm835 = vcmp.lt.s32.totalorder %v822, 2
        %vm836 = vcmp.lt.s32.totalorder %v823, 2
        %vm837 = vmand %vm833, %vm835
        %vm838 = vmand %vm834, %vm836
        %v839 = vsel %vm837, %v828, 0.0
        %v840 = vsel %vm838, %v832, 0.0
        %vm841 = vcmask 7168
        %v842 = vsel %vm841, %v839, 0.0
        %v843 = vsel %vm841, %v840, 0.0
        %v844 = vadd.f32 %v842, %v843
        %845 = vadd.xlane.f32.xlu0 %v844
        %v846 = vpop.xlane.xlu0 %845
        %v847 = vrot.slane %v846, 4
        %v848 = vadd.f32 %v846, %v847
        %v849 = vrot.slane %v848, 2
        %v850 = vadd.f32 %v848, %v849
        %v851 = vrot.slane %v850, 1
        %v852 = vadd.f32 %v850, %v851
        %s853 = vtos %v852
        %s854 = smul.f32 %s853, 0.0025510204
        %v855 = vstv %s854
        %v856 = vsel %vm837, %v855, 0.0
        %v857 = vsel %vm838, %v855, 0.0
        %vm858 = vcmp.ge.s32.totalorder %v822, 2
        %vm859 = vcmp.ge.s32.totalorder %v823, 2
        %vm860 = vcmp.lt.s32.totalorder %v822, 4
        %vm861 = vcmp.lt.s32.totalorder %v823, 4
        %vm862 = vmand %vm858, %vm860
        %vm863 = vmand %vm859, %vm861
        %v864 = vsel %vm862, %v828, 0.0
        %v865 = vsel %vm863, %v832, 0.0
        %v866 = vsel %vm841, %v864, 0.0
        %v867 = vsel %vm841, %v865, 0.0
        %v868 = vadd.f32 %v866, %v867
        %869 = vadd.xlane.f32.xlu0 %v868
        %v870 = vpop.xlane.xlu0 %869
        %v871 = vrot.slane %v870, 4
        %v872 = vadd.f32 %v870, %v871
        %v873 = vrot.slane %v872, 2
        %v874 = vadd.f32 %v872, %v873
        %v875 = vrot.slane %v874, 1
        %v876 = vadd.f32 %v874, %v875
        %s877 = vtos %v876
        %s878 = smul.f32 %s877, 0.0025510204
        %v879 = vstv %s878
        %v880 = vsel %vm862, %v879, %v856
        %v881 = vsel %vm863, %v879, %v857
        %vm882 = vcmp.ge.s32.totalorder %v822, 4
        %vm883 = vcmp.ge.s32.totalorder %v823, 4
        %vm884 = vcmp.lt.s32.totalorder %v822, 6
        %vm885 = vcmp.lt.s32.totalorder %v823, 6
        %vm886 = vmand %vm882, %vm884
        %vm887 = vmand %vm883, %vm885
        %v888 = vsel %vm886, %v828, 0.0
        %v889 = vsel %vm887, %v832, 0.0
        %v890 = vsel %vm841, %v888, 0.0
        %v891 = vsel %vm841, %v889, 0.0
        %v892 = vadd.f32 %v890, %v891
        %893 = vadd.xlane.f32.xlu0 %v892
        %v894 = vpop.xlane.xlu0 %893
        %v895 = vrot.slane %v894, 4
        %v896 = vadd.f32 %v894, %v895
        %v897 = vrot.slane %v896, 2
        %v898 = vadd.f32 %v896, %v897
        %v899 = vrot.slane %v898, 1
        %v900 = vadd.f32 %v898, %v899
        %s901 = vtos %v900
        %s902 = smul.f32 %s901, 0.0025510204
        %v903 = vstv %s902
        %v904 = vsel %vm886, %v903, %v880
        %v905 = vsel %vm887, %v903, %v881
        %vm906 = vcmp.ge.s32.totalorder %v822, 6
        %vm907 = vcmp.ge.s32.totalorder %v823, 6
        %vm908 = vcmp.lt.s32.totalorder %v822, 8
        %vm909 = vcmp.lt.s32.totalorder %v823, 8
        %vm910 = vmand %vm906, %vm908
        %vm911 = vmand %vm907, %vm909
        %v912 = vsel %vm910, %v828, 0.0
        %v913 = vsel %vm911, %v832, 0.0
        %v914 = vsel %vm841, %v912, 0.0
        %v915 = vsel %vm841, %v913, 0.0
        %v916 = vadd.f32 %v914, %v915
        %917 = vadd.xlane.f32.xlu0 %v916
        %v918 = vpop.xlane.xlu0 %917
        %v919 = vrot.slane %v918, 4
        %v920 = vadd.f32 %v918, %v919
        %v921 = vrot.slane %v920, 2
        %v922 = vadd.f32 %v920, %v921
        %v923 = vrot.slane %v922, 1
        %v924 = vadd.f32 %v922, %v923
        %s925 = vtos %v924
        %s926 = smul.f32 %s925, 0.0025510204
        %v927 = vstv %s926
        %v928 = vsel %vm910, %v927, %v904
        %v929 = vsel %vm911, %v927, %v905
        %vm930 = vcmp.ge.s32.totalorder %v822, 8
        %vm931 = vcmp.ge.s32.totalorder %v823, 8
        %vm932 = vcmp.lt.s32.totalorder %v822, 10
        %vm933 = vcmp.lt.s32.totalorder %v823, 10
        %vm934 = vmand %vm930, %vm932
        %vm935 = vmand %vm931, %vm933
        %v936 = vsel %vm934, %v828, 0.0
        %v937 = vsel %vm935, %v832, 0.0
        %v938 = vsel %vm841, %v936, 0.0
        %v939 = vsel %vm841, %v937, 0.0
        %v940 = vadd.f32 %v938, %v939
        %941 = vadd.xlane.f32.xlu0 %v940
        %v942 = vpop.xlane.xlu0 %941
        %v943 = vrot.slane %v942, 4
        %v944 = vadd.f32 %v942, %v943
        %v945 = vrot.slane %v944, 2
        %v946 = vadd.f32 %v944, %v945
        %v947 = vrot.slane %v946, 1
        %v948 = vadd.f32 %v946, %v947
        %s949 = vtos %v948
        %s950 = smul.f32 %s949, 0.0025510204
        %v951 = vstv %s950
        %v952 = vsel %vm934, %v951, %v928
        %v953 = vsel %vm935, %v951, %v929
        %vm954 = vcmp.ge.s32.totalorder %v822, 10
        %vm955 = vcmp.ge.s32.totalorder %v823, 10
        %vm956 = vcmp.lt.s32.totalorder %v822, 12
        %vm957 = vcmp.lt.s32.totalorder %v823, 12
        %vm958 = vmand %vm954, %vm956
        %vm959 = vmand %vm955, %vm957
        %v960 = vsel %vm958, %v828, 0.0
        %v961 = vsel %vm959, %v832, 0.0
        %v962 = vsel %vm841, %v960, 0.0
        %v963 = vsel %vm841, %v961, 0.0
        %v964 = vadd.f32 %v962, %v963
        %965 = vadd.xlane.f32.xlu0 %v964
        %v966 = vpop.xlane.xlu0 %965
        %v967 = vrot.slane %v966, 4
        %v968 = vadd.f32 %v966, %v967
        %v969 = vrot.slane %v968, 2
        %v970 = vadd.f32 %v968, %v969
        %v971 = vrot.slane %v970, 1
        %v972 = vadd.f32 %v970, %v971
        %s973 = vtos %v972
        %s974 = smul.f32 %s973, 0.0025510204
        %v975 = vstv %s974
        %v976 = vsel %vm958, %v975, %v952
        %v977 = vsel %vm959, %v975, %v953
        %vm978 = vcmp.ge.s32.totalorder %v822, 12
        %vm979 = vcmp.ge.s32.totalorder %v823, 12
        %vm980 = vcmp.lt.s32.totalorder %v822, 14
        %vm981 = vcmp.lt.s32.totalorder %v823, 14
        %vm982 = vmand %vm978, %vm980
        %vm983 = vmand %vm979, %vm981
        %v984 = vsel %vm982, %v828, 0.0
        %v985 = vsel %vm983, %v832, 0.0
        %v986 = vsel %vm841, %v984, 0.0
        %v987 = vsel %vm841, %v985, 0.0
        %v988 = vadd.f32 %v986, %v987
        %989 = vadd.xlane.f32.xlu0 %v988
        %v990 = vpop.xlane.xlu0 %989
        %v991 = vrot.slane %v990, 4
        %v992 = vadd.f32 %v990, %v991
        %v993 = vrot.slane %v992, 2
        %v994 = vadd.f32 %v992, %v993
        %v995 = vrot.slane %v994, 1
        %v996 = vadd.f32 %v994, %v995
        %s997 = vtos %v996
        %s998 = smul.f32 %s997, 0.0025510204
        %v999 = vstv %s998
        %v1000 = vsel %vm982, %v999, %v976
        %v1001 = vsel %vm983, %v999, %v977
        %vm1002 = vcmp.ge.s32.totalorder %v822, 14
        %vm1003 = vcmp.ge.s32.totalorder %v823, 14
        %vm1004 = vcmp.lt.s32.totalorder %v822, 16
        %vm1005 = vcmp.lt.s32.totalorder %v823, 16
        %vm1006 = vmand %vm1002, %vm1004
        %vm1007 = vmand %vm1003, %vm1005
        %v1008 = vsel %vm1006, %v828, 0.0
        %v1009 = vsel %vm1007, %v832, 0.0
        %v1010 = vsel %vm841, %v1008, 0.0
        %v1011 = vsel %vm841, %v1009, 0.0
        %v1012 = vadd.f32 %v1010, %v1011
        %1013 = vadd.xlane.f32.xlu0 %v1012
        %v1014 = vpop.xlane.xlu0 %1013
        %v1015 = vrot.slane %v1014, 4
        %v1016 = vadd.f32 %v1014, %v1015
        %v1017 = vrot.slane %v1016, 2
        %v1018 = vadd.f32 %v1016, %v1017
        %v1019 = vrot.slane %v1018, 1
        %v1020 = vadd.f32 %v1018, %v1019
        %s1021 = vtos %v1020
        %s1022 = smul.f32 %s1021, 0.0025510204
        %v1023 = vstv %s1022
        %v1024 = vsel %vm1006, %v1023, %v1000
        %v1025 = vsel %vm1007, %v1023, %v1001
        %v1026 = vsub.f32 %v814, %v1024
        %v1027 = vsub.f32 %v816, %v1024
        %v1028 = vsub.f32 %v818, %v1025
        %v1029 = vsub.f32 %v820, %v1025
        %v1030 = vmul.f32 %v1026, %v1026
        %v1031 = vmul.f32 %v1027, %v1027
        %v1032 = vmul.f32 %v1028, %v1028
        %v1033 = vmul.f32 %v1029, %v1029
        %v1034 = vsel %vm824, %v1031, 0.0
        %v1035 = vadd.f32 %v1030, %v1034
        %1036 = vadd.xlane.f32.xlu0 %v1035
        %v1037 = vpop.xlane.xlu0 %1036
        %v1038 = vsel %vm824, %v1033, 0.0
        %v1039 = vadd.f32 %v1032, %v1038
        %1040 = vadd.xlane.f32.xlu0 %v1039
        %v1041 = vpop.xlane.xlu0 %1040
        %v1042 = vsel %vm837, %v1037, 0.0
        %v1043 = vsel %vm838, %v1041, 0.0
        %v1044 = vsel %vm841, %v1042, 0.0
        %v1045 = vsel %vm841, %v1043, 0.0
        %v1046 = vadd.f32 %v1044, %v1045
        %1047 = vadd.xlane.f32.xlu0 %v1046
        %v1048 = vpop.xlane.xlu0 %1047
        %v1049 = vrot.slane %v1048, 4
        %v1050 = vadd.f32 %v1048, %v1049
        %v1051 = vrot.slane %v1050, 2
        %v1052 = vadd.f32 %v1050, %v1051
        %v1053 = vrot.slane %v1052, 1
        %v1054 = vadd.f32 %v1052, %v1053
        %s1055 = vtos %v1054
        %s1056 = smul.f32 %s1055, 0.0025510204
        %v1057 = vstv %s1056
        %v1058 = vsel %vm837, %v1057, 0.0
        %v1059 = vsel %vm838, %v1057, 0.0
        %v1060 = vsel %vm862, %v1037, 0.0
        %v1061 = vsel %vm863, %v1041, 0.0
        %v1062 = vsel %vm841, %v1060, 0.0
        %v1063 = vsel %vm841, %v1061, 0.0
        %v1064 = vadd.f32 %v1062, %v1063
        %1065 = vadd.xlane.f32.xlu0 %v1064
        %v1066 = vpop.xlane.xlu0 %1065
        %v1067 = vrot.slane %v1066, 4
        %v1068 = vadd.f32 %v1066, %v1067
        %v1069 = vrot.slane %v1068, 2
        %v1070 = vadd.f32 %v1068, %v1069
        %v1071 = vrot.slane %v1070, 1
        %v1072 = vadd.f32 %v1070, %v1071
        %s1073 = vtos %v1072
        %s1074 = smul.f32 %s1073, 0.0025510204
        %v1075 = vstv %s1074
        %v1076 = vsel %vm862, %v1075, %v1058
        %v1077 = vsel %vm863, %v1075, %v1059
        %v1078 = vsel %vm886, %v1037, 0.0
        %v1079 = vsel %vm887, %v1041, 0.0
        %v1080 = vsel %vm841, %v1078, 0.0
        %v1081 = vsel %vm841, %v1079, 0.0
        %v1082 = vadd.f32 %v1080, %v1081
        %1083 = vadd.xlane.f32.xlu0 %v1082
        %v1084 = vpop.xlane.xlu0 %1083
        %v1085 = vrot.slane %v1084, 4
        %v1086 = vadd.f32 %v1084, %v1085
        %v1087 = vrot.slane %v1086, 2
        %v1088 = vadd.f32 %v1086, %v1087
        %v1089 = vrot.slane %v1088, 1
        %v1090 = vadd.f32 %v1088, %v1089
        %s1091 = vtos %v1090
        %s1092 = smul.f32 %s1091, 0.0025510204
        %v1093 = vstv %s1092
        %v1094 = vsel %vm886, %v1093, %v1076
        %v1095 = vsel %vm887, %v1093, %v1077
        %v1096 = vsel %vm910, %v1037, 0.0
        %v1097 = vsel %vm911, %v1041, 0.0
        %v1098 = vsel %vm841, %v1096, 0.0
        %v1099 = vsel %vm841, %v1097, 0.0
        %v1100 = vadd.f32 %v1098, %v1099
        %1101 = vadd.xlane.f32.xlu0 %v1100
        %v1102 = vpop.xlane.xlu0 %1101
        %v1103 = vrot.slane %v1102, 4
        %v1104 = vadd.f32 %v1102, %v1103
        %v1105 = vrot.slane %v1104, 2
        %v1106 = vadd.f32 %v1104, %v1105
        %v1107 = vrot.slane %v1106, 1
        %v1108 = vadd.f32 %v1106, %v1107
        %s1109 = vtos %v1108
        %s1110 = smul.f32 %s1109, 0.0025510204
        %v1111 = vstv %s1110
        %v1112 = vsel %vm910, %v1111, %v1094
        %v1113 = vsel %vm911, %v1111, %v1095
        %v1114 = vsel %vm934, %v1037, 0.0
        %v1115 = vsel %vm935, %v1041, 0.0
        %v1116 = vsel %vm841, %v1114, 0.0
        %v1117 = vsel %vm841, %v1115, 0.0
        %v1118 = vadd.f32 %v1116, %v1117
        %1119 = vadd.xlane.f32.xlu0 %v1118
        %v1120 = vpop.xlane.xlu0 %1119
        %v1121 = vrot.slane %v1120, 4
        %v1122 = vadd.f32 %v1120, %v1121
        %v1123 = vrot.slane %v1122, 2
        %v1124 = vadd.f32 %v1122, %v1123
        %v1125 = vrot.slane %v1124, 1
        %v1126 = vadd.f32 %v1124, %v1125
        %s1127 = vtos %v1126
        %s1128 = smul.f32 %s1127, 0.0025510204
        %v1129 = vstv %s1128
        %v1130 = vsel %vm934, %v1129, %v1112
        %v1131 = vsel %vm935, %v1129, %v1113
        %v1132 = vsel %vm958, %v1037, 0.0
        %v1133 = vsel %vm959, %v1041, 0.0
        %v1134 = vsel %vm841, %v1132, 0.0
        %v1135 = vsel %vm841, %v1133, 0.0
        %v1136 = vadd.f32 %v1134, %v1135
        %1137 = vadd.xlane.f32.xlu0 %v1136
        %v1138 = vpop.xlane.xlu0 %1137
        %v1139 = vrot.slane %v1138, 4
        %v1140 = vadd.f32 %v1138, %v1139
        %v1141 = vrot.slane %v1140, 2
        %v1142 = vadd.f32 %v1140, %v1141
        %v1143 = vrot.slane %v1142, 1
        %v1144 = vadd.f32 %v1142, %v1143
        %s1145 = vtos %v1144
        %s1146 = smul.f32 %s1145, 0.0025510204
        %v1147 = vstv %s1146
        %v1148 = vsel %vm958, %v1147, %v1130
        %v1149 = vsel %vm959, %v1147, %v1131
        %v1150 = vsel %vm982, %v1037, 0.0
        %v1151 = vsel %vm983, %v1041, 0.0
        %v1152 = vsel %vm841, %v1150, 0.0
        %v1153 = vsel %vm841, %v1151, 0.0
        %v1154 = vadd.f32 %v1152, %v1153
        %1155 = vadd.xlane.f32.xlu0 %v1154
        %v1156 = vpop.xlane.xlu0 %1155
        %v1157 = vrot.slane %v1156, 4
        %v1158 = vadd.f32 %v1156, %v1157
        %v1159 = vrot.slane %v1158, 2
        %v1160 = vadd.f32 %v1158, %v1159
        %v1161 = vrot.slane %v1160, 1
        %v1162 = vadd.f32 %v1160, %v1161
        %s1163 = vtos %v1162
        %s1164 = smul.f32 %s1163, 0.0025510204
        %v1165 = vstv %s1164
        %v1166 = vsel %vm982, %v1165, %v1148
        %v1167 = vsel %vm983, %v1165, %v1149
        %v1168 = vsel %vm1006, %v1037, 0.0
        %v1169 = vsel %vm1007, %v1041, 0.0
        %v1170 = vsel %vm841, %v1168, 0.0
        %v1171 = vsel %vm841, %v1169, 0.0
        %v1172 = vadd.f32 %v1170, %v1171
        %1173 = vadd.xlane.f32.xlu0 %v1172
        %v1174 = vpop.xlane.xlu0 %1173
        %v1175 = vrot.slane %v1174, 4
        %v1176 = vadd.f32 %v1174, %v1175
        %v1177 = vrot.slane %v1176, 2
        %v1178 = vadd.f32 %v1176, %v1177
        %v1179 = vrot.slane %v1178, 1
        %v1180 = vadd.f32 %v1178, %v1179
        %s1181 = vtos %v1180
        %s1182 = smul.f32 %s1181, 0.0025510204
        %v1183 = vstv %s1182
        %v1184 = vsel %vm1006, %v1183, %v1166
        %v1185 = vsel %vm1007, %v1183, %v1167
        %v1186 = vadd.f32 %v1184, 1e-05
        %v1187 = vadd.f32 %v1185, 1e-05
        %v1188 = vrsqrt.pop %v1186
        %v1189 = vrsqrt.pop %v1187
        %v1190 = vmul.f32 %v1188, %v179
        %v1191 = vmul.f32 %v1189, %v180
        %1193 = vset.pattern.permute.xlu0 1
        %1194 = vperm.xlu0 %1193, %v1190
        %v1195 = vpop.permute.xlu0 %1194
        %1198 = vset.pattern.permute.xlu0 1
        %1199 = vperm.xlu0 %1198, %v1191
        %v1200 = vpop.permute.xlu0 %1199
        %v1202 = vmul.f32 %v1026, %v1195
        %v1203 = vmul.f32 %v1027, %v1195
        %v1204 = vmul.f32 %v1028, %v1200
        %v1205 = vmul.f32 %v1029, %v1200
        %1206 = vset.pattern.permute.xlu0 2
        %1207 = vperm.xlu0 %1206, %v179
        %v1208 = vpop.permute.xlu0 %1207
        %1210 = vset.pattern.permute.xlu0 2
        %1211 = vperm.xlu0 %1210, %v180
        %v1212 = vpop.permute.xlu0 %1211
        %v1214 = vadd.f32 %v1202, %v1208
        %v1215 = vadd.f32 %v1203, %v1208
        %v1216 = vadd.f32 %v1204, %v1212
        %v1217 = vadd.f32 %v1205, %v1212
        %1218 = vst [vmem:[%s163] sm:$0xff] %v1214
        %1219 = vst.msk [vmem:[%s163 + $0x8] sm:$0xff] %vm824, %v1215
        %1220 = vst [vmem:[%s163 + $0x10] sm:$0xff] %v1216
        %1221 = vst.msk [vmem:[%s163 + $0x18] sm:$0xff] %vm824, %v1217
        %s1222 = sand.u32 %s93, 1
        %s1223 = scalar_lea.sflag [#allocation3], %s1222
        %s1224 = sand.u32 %s93, 1
        %s1225 = smul.addr %s1224, 32
        %s1226 = scalar_lea.vmem [#allocation2], %s1225
        // Predicated region
        $region33: #{tpu_custom_call.1} parent=31 // pred_check
          %p1227 = pneg %p103
        $region34: #{tpu_custom_call.1} parent=31 // pred_check_branch
          %1229 = sbr.rel (%p1227) target = $region36
        $region35: #{tpu_custom_call.1} parent=31 // pred_region
          %s1231 = ssub.s32 512, 512
          %1232 = vsyncadd %s1223, %s1231
          %s1233 = smul.addr %s17, 4
          %s1234 = smul.addr %s1233, 128
          %s1235 = scalar_lea.hbm %s3, %s1234
          %s1236 = sshll.u32 %s1226, 4
          %s1237 = int_to_ptr.vmem [resolvable:$true] %s1236
          %1242 = dma.vmem_to_hbm [thread:$0]  %s1237, 512, %s1235, %s1223, 256, 256, 16
        $region36: #{tpu_custom_call.1} parent=31 // pred_fallthru
          _
      $region32: #{tpu_custom_call.1} parent=5 // pred_fallthru
        _
      %p1243 = scmp.le.s32.totalorder 2, %s12
      // Predicated region
      $region37: #{tpu_custom_call.1} parent=5 // pred_check
        %p1244 = pneg %p1243
      $region38: #{tpu_custom_call.1} parent=5 // pred_check_branch
        %1246 = sbr.rel (%p1244) target = $region40
      $region39: #{tpu_custom_call.1} parent=5 // pred_region
        %s1247 = ssub.s32 %s12, 2
        // Predicated region
        $region41: #{tpu_custom_call.1} parent=39 // pred_check
          %p1248 = pneg %p109
        $region42: #{tpu_custom_call.1} parent=39 // pred_check_branch
          %1250 = sbr.rel (%p1248) target = $region44
        $region43: #{tpu_custom_call.1} parent=39 // pred_region
          %s1251 = sand.u32 %s94, 1
          %s1252 = scalar_lea.sflag [#allocation3], %s1251
          %s1253 = sand.u32 %s94, 1
          %s1254 = smul.addr %s1253, 32
          %s1255 = scalar_lea.vmem [#allocation2], %s1254
          %1256 = dma.done %s1252, 512
        $region44: #{tpu_custom_call.1} parent=39 // pred_fallthru
          _
      $region40: #{tpu_custom_call.1} parent=5 // pred_fallthru
        _
    $region6: #{tpu_custom_call.1} parent=1 // loop_footer
      %s16 = sadd.s32 1, %s12
    $region7: #{tpu_custom_call.1} parent=1 // loop_footer_branch
      %11 = sbr.rel target = $region3
    $region8: #{tpu_custom_call.1} parent=1 // loop_exit
      _
    %1257 = vsyncpa [#allocation3], 1
    %s1258 = scalar_lea.sflag [#allocation3], 1
    %1259 = vsyncpa %s1258, 1

</llo_original>
